<compile_context>
chip_gen: v5e
topology: v5e:2x2
jax: 0.10.0
libtpu: 0.0.40
codegen_flags: <defaults>
</compile_context>

<pallas_src>
import functools

import jax
import jax.numpy as jnp
import numpy as np
from jax.experimental import pallas as pl
from jax.experimental.pallas import tpu as pltpu


def _shift2d(a, dh, dw):
    """a: (H, W, C) value. Returns t with t[i, j] = a[i+dh, j+dw], zero-filled OOB."""
    h, w, c = a.shape
    if dh == -1:
        a = jnp.concatenate([jnp.zeros((1, w, c), a.dtype), a[:-1]], axis=0)
    elif dh == 1:
        a = jnp.concatenate([a[1:], jnp.zeros((1, w, c), a.dtype)], axis=0)
    if dw == -1:
        a = jnp.concatenate([jnp.zeros((h, 1, c), a.dtype), a[:, :-1]], axis=1)
    elif dw == 1:
        a = jnp.concatenate([a[:, 1:], jnp.zeros((h, 1, c), a.dtype)], axis=1)
    return a


def _im2col_3x3(a, stride):
    """a: (H, W, C) -> (H_out*W_out, 9*C) patches of a 3x3 / pad=1 / stride conv."""
    h, w, c = a.shape
    taps = []
    for kh in range(3):
        for kw in range(3):
            t = _shift2d(a, kh - 1, kw - 1)
            if stride != 1:
                t = t[::stride, ::stride, :]
            taps.append(t)
    pat = jnp.concatenate(taps, axis=-1)           # (H_out, W_out, 9*C)
    h_out, w_out = pat.shape[0], pat.shape[1]
    return pat.reshape(h_out * w_out, 9 * c)


def basic_block_kernel(x_ref, w1_ref, s1_ref, b1_ref, w2_ref, s2_ref, b2_ref,
                       *rest, stride, has_projection):
    if has_projection:
        ws_ref, ss_ref, bs_ref, out_ref = rest
    else:
        (out_ref,) = rest

    _, h, w, c_in = x_ref.shape
    _, h_out, w_out, planes = out_ref.shape

    x = x_ref[...].reshape(h, w, c_in)             # (H, W, Cin) bf16

    # conv1 (3x3, stride, pad=1) + bn1 (folded) + relu : one im2col MXU matmul.
    acc1 = jnp.dot(_im2col_3x3(x, stride), w1_ref[...],
                   preferred_element_type=jnp.float32)
    out1 = jnp.maximum(acc1 * s1_ref[...] + b1_ref[...], 0.0)

    # conv2 (3x3, stride 1, pad=1) + bn2 (folded) : one im2col MXU matmul.
    out1_hw = out1.astype(jnp.bfloat16).reshape(h_out, w_out, planes)
    acc2 = jnp.dot(_im2col_3x3(out1_hw, 1), w2_ref[...],
                   preferred_element_type=jnp.float32)
    out2 = acc2 * s2_ref[...] + b2_ref[...]

    # shortcut: 1x1 projection (+ folded bn) only when needed, else residual add.
    if has_projection:
        xs = x[::stride, ::stride, :] if stride != 1 else x
        xs = xs.reshape(h_out * w_out, c_in)
        sc = jnp.dot(xs, ws_ref[...], preferred_element_type=jnp.float32)
        sc = sc * ss_ref[...] + bs_ref[...]
    else:
        sc = x.reshape(h_out * w_out, planes).astype(jnp.float32)

    out = jnp.maximum(out2 + sc, 0.0)
    out_ref[...] = out.reshape(out_ref.shape).astype(out_ref.dtype)


def basic_block(x_nchw, p, stride=1):
    """x_nchw: (N, Cin, H, W) float32.  Returns (N, planes, Hout, Wout) float32."""
    n, c_in, h, w = x_nchw.shape
    planes = p["w1"].shape[-1]
    h_out = (h - 1) // stride + 1
    w_out = (w - 1) // stride + 1
    has_projection = "ws" in p

    # NHWC; bf16 activations/weights for the MXU (BN scale/bias stay f32).
    x = jnp.transpose(x_nchw, (0, 2, 3, 1)).astype(jnp.bfloat16)
    w1 = p["w1"].astype(jnp.bfloat16).reshape(9 * c_in, planes)
    w2 = p["w2"].astype(jnp.bfloat16).reshape(9 * planes, planes)

    bn_spec = pl.BlockSpec((1, planes), lambda b: (0, 0))
    in_specs = [
        pl.BlockSpec((1, h, w, c_in), lambda b: (b, 0, 0, 0)),
        pl.BlockSpec((9 * c_in, planes), lambda b: (0, 0)),
        bn_spec, bn_spec,
        pl.BlockSpec((9 * planes, planes), lambda b: (0, 0)),
        bn_spec, bn_spec,
    ]
    args = [x, w1, p["s1"], p["b1"], w2, p["s2"], p["b2"]]
    if has_projection:
        in_specs += [pl.BlockSpec((c_in, planes), lambda b: (0, 0)),
                     bn_spec, bn_spec]
        args += [p["ws"].astype(jnp.bfloat16), p["ss"], p["bs"]]

    out_nhwc = pl.pallas_call(
        functools.partial(basic_block_kernel, stride=stride,
                          has_projection=has_projection),
        out_shape=jax.ShapeDtypeStruct((n, h_out, w_out, planes), jnp.float32),
        grid=(n,),
        in_specs=in_specs,
        out_specs=pl.BlockSpec((1, h_out, w_out, planes),
                               lambda b: (b, 0, 0, 0)),
        compiler_params=pltpu.CompilerParams(
            dimension_semantics=("parallel",)),
    )(*args)

    return jnp.transpose(out_nhwc, (0, 3, 1, 2))   # back to NCHW


def init_params(key, in_planes, planes, stride, eps=1e-5):
    ks = jax.random.split(key, 16)

    def bn_fold(kg, kb, km, kv, c):
        gamma = 1.0 + 0.1 * jax.random.normal(kg, (c,), jnp.float32)
        beta = 0.1 * jax.random.normal(kb, (c,), jnp.float32)
        mean = 0.1 * jax.random.normal(km, (c,), jnp.float32)
        var = jax.random.uniform(kv, (c,), jnp.float32, minval=0.5, maxval=1.5)
        scale = gamma / jnp.sqrt(var + eps)
        bias = beta - mean * scale
        return scale.reshape(1, c), bias.reshape(1, c)

    p = {}
    p["w1"] = 0.1 * jax.random.normal(ks[0], (3, 3, in_planes, planes), jnp.float32)
    p["s1"], p["b1"] = bn_fold(ks[1], ks[2], ks[3], ks[4], planes)
    p["w2"] = 0.1 * jax.random.normal(ks[5], (3, 3, planes, planes), jnp.float32)
    p["s2"], p["b2"] = bn_fold(ks[6], ks[7], ks[8], ks[9], planes)

    if stride != 1 or in_planes != planes:         # projection shortcut
        p["ws"] = 0.1 * jax.random.normal(ks[10], (in_planes, planes), jnp.float32)
        p["ss"], p["bs"] = bn_fold(ks[11], ks[12], ks[13], ks[14], planes)
    return p


def reference_block(x_nchw, p, stride=1):
    """Pure-JAX reference with the same bf16-input / f32-accumulate numerics."""
    x = jnp.transpose(x_nchw, (0, 2, 3, 1)).astype(jnp.bfloat16)
    conv = functools.partial(jax.lax.conv_general_dilated,
                             dimension_numbers=("NHWC", "HWIO", "NHWC"),
                             preferred_element_type=jnp.float32)
    out = conv(x, p["w1"].astype(jnp.bfloat16), (stride, stride),
               ((1, 1), (1, 1))) * p["s1"] + p["b1"]
    out = jnp.maximum(out, 0.0)
    out = conv(out.astype(jnp.bfloat16), p["w2"].astype(jnp.bfloat16), (1, 1),
               ((1, 1), (1, 1))) * p["s2"] + p["b2"]
    if "ws" in p:
        sc = conv(x, p["ws"].astype(jnp.bfloat16)[None, None],
                  (stride, stride), ((0, 0), (0, 0))) * p["ss"] + p["bs"]
    else:
        sc = x.astype(jnp.float32)
    out = jnp.maximum(out + sc, 0.0)
    return jnp.transpose(out, (0, 3, 1, 2))


if __name__ == "__main__":
    key = jax.random.PRNGKey(0)

    N, H, W = 2, 16, 16
    configs = [
        (4, 8, 1),   # channel change -> projection-shortcut path
        (8, 8, 1),   # identity-shortcut path (no projection matmul)
    ]
    for i, (c_in, planes, stride) in enumerate(configs):
        k_x, k_p = jax.random.split(jax.random.fold_in(key, i))
        x = jax.random.normal(k_x, (N, c_in, H, W), jnp.float32)
        params = init_params(k_p, c_in, planes, stride)

        out = jax.block_until_ready(basic_block(x, params, stride=stride))
        ref = reference_block(x, params, stride=stride)
        np.testing.assert_allclose(np.asarray(out), np.asarray(ref),
                                   atol=2e-3, rtol=2e-3)

    print("KERNEL_OK")
</pallas_src>

<mosaic_0001>
module attributes {stable_mosaic.version = 11 : i64} {
  func.func @basic_block_kernel(%arg0: i32, %arg1: memref<1x16x16x4xbf16, #tpu.memory_space<vmem>>, %arg2: memref<36x8xbf16, #tpu.memory_space<vmem>>, %arg3: memref<1x8xf32, #tpu.memory_space<vmem>>, %arg4: memref<1x8xf32, #tpu.memory_space<vmem>>, %arg5: memref<72x8xbf16, #tpu.memory_space<vmem>>, %arg6: memref<1x8xf32, #tpu.memory_space<vmem>>, %arg7: memref<1x8xf32, #tpu.memory_space<vmem>>, %arg8: memref<4x8xbf16, #tpu.memory_space<vmem>>, %arg9: memref<1x8xf32, #tpu.memory_space<vmem>>, %arg10: memref<1x8xf32, #tpu.memory_space<vmem>>, %arg11: memref<1x16x16x8xf32, #tpu.memory_space<vmem>>) attributes {dimension_semantics = [#tpu.dimension_semantics<parallel>], iteration_bounds = array<i64: 2>, scalar_prefetch = 0 : i64, scratch_operands = 0 : i64, tpu.core_type = #tpu.core_type<tc>, window_params = [{transform_indices = @transform_0, window_bounds = array<i64: 1, 16, 16, 4>}, {pipeline_mode = #tpu.pipeline_mode<synchronous>, transform_indices = @transform_1, window_bounds = array<i64: 36, 8>}, {pipeline_mode = #tpu.pipeline_mode<synchronous>, transform_indices = @transform_2, window_bounds = array<i64: 1, 8>}, {pipeline_mode = #tpu.pipeline_mode<synchronous>, transform_indices = @transform_3, window_bounds = array<i64: 1, 8>}, {pipeline_mode = #tpu.pipeline_mode<synchronous>, transform_indices = @transform_4, window_bounds = array<i64: 72, 8>}, {pipeline_mode = #tpu.pipeline_mode<synchronous>, transform_indices = @transform_5, window_bounds = array<i64: 1, 8>}, {pipeline_mode = #tpu.pipeline_mode<synchronous>, transform_indices = @transform_6, window_bounds = array<i64: 1, 8>}, {pipeline_mode = #tpu.pipeline_mode<synchronous>, transform_indices = @transform_7, window_bounds = array<i64: 4, 8>}, {pipeline_mode = #tpu.pipeline_mode<synchronous>, transform_indices = @transform_8, window_bounds = array<i64: 1, 8>}, {pipeline_mode = #tpu.pipeline_mode<synchronous>, transform_indices = @transform_9, window_bounds = array<i64: 1, 8>}, {transform_indices = @transform_10, window_bounds = array<i64: 1, 16, 16, 8>}]} {
    %c0 = arith.constant 0 : index
    %c0_0 = arith.constant 0 : index
    %c0_1 = arith.constant 0 : index
    %c0_2 = arith.constant 0 : index
    %0 = vector.load %arg1[%c0, %c0_0, %c0_1, %c0_2] : memref<1x16x16x4xbf16, #tpu.memory_space<vmem>>, vector<1x16x16x4xbf16>
    %1 = vector.shape_cast %0 : vector<1x16x16x4xbf16> to vector<16x16x4xbf16>
    %cst = arith.constant 0.000000e+00 : bf16
    %2 = vector.broadcast %cst : bf16 to vector<1x16x4xbf16>
    %3 = vector.extract_strided_slice %1 {offsets = [0, 0, 0], sizes = [15, 16, 4], strides = [1, 1, 1]} : vector<16x16x4xbf16> to vector<15x16x4xbf16>
    %4 = tpu.concatenate %2, %3 in 0 : vector<1x16x4xbf16>, vector<15x16x4xbf16> -> vector<16x16x4xbf16>
    %cst_3 = arith.constant 0.000000e+00 : bf16
    %5 = vector.broadcast %cst_3 : bf16 to vector<16x1x4xbf16>
    %6 = vector.extract_strided_slice %4 {offsets = [0, 0, 0], sizes = [16, 15, 4], strides = [1, 1, 1]} : vector<16x16x4xbf16> to vector<16x15x4xbf16>
    %7 = tpu.concatenate %5, %6 in 1 : vector<16x1x4xbf16>, vector<16x15x4xbf16> -> vector<16x16x4xbf16>
    %cst_4 = arith.constant 0.000000e+00 : bf16
    %8 = vector.broadcast %cst_4 : bf16 to vector<1x16x4xbf16>
    %9 = vector.extract_strided_slice %1 {offsets = [0, 0, 0], sizes = [15, 16, 4], strides = [1, 1, 1]} : vector<16x16x4xbf16> to vector<15x16x4xbf16>
    %10 = tpu.concatenate %8, %9 in 0 : vector<1x16x4xbf16>, vector<15x16x4xbf16> -> vector<16x16x4xbf16>
    %cst_5 = arith.constant 0.000000e+00 : bf16
    %11 = vector.broadcast %cst_5 : bf16 to vector<1x16x4xbf16>
    %12 = vector.extract_strided_slice %1 {offsets = [0, 0, 0], sizes = [15, 16, 4], strides = [1, 1, 1]} : vector<16x16x4xbf16> to vector<15x16x4xbf16>
    %13 = tpu.concatenate %11, %12 in 0 : vector<1x16x4xbf16>, vector<15x16x4xbf16> -> vector<16x16x4xbf16>
    %14 = vector.extract_strided_slice %13 {offsets = [0, 1, 0], sizes = [16, 15, 4], strides = [1, 1, 1]} : vector<16x16x4xbf16> to vector<16x15x4xbf16>
    %cst_6 = arith.constant 0.000000e+00 : bf16
    %15 = vector.broadcast %cst_6 : bf16 to vector<16x1x4xbf16>
    %16 = tpu.concatenate %14, %15 in 1 : vector<16x15x4xbf16>, vector<16x1x4xbf16> -> vector<16x16x4xbf16>
    %cst_7 = arith.constant 0.000000e+00 : bf16
    %17 = vector.broadcast %cst_7 : bf16 to vector<16x1x4xbf16>
    %18 = vector.extract_strided_slice %1 {offsets = [0, 0, 0], sizes = [16, 15, 4], strides = [1, 1, 1]} : vector<16x16x4xbf16> to vector<16x15x4xbf16>
    %19 = tpu.concatenate %17, %18 in 1 : vector<16x1x4xbf16>, vector<16x15x4xbf16> -> vector<16x16x4xbf16>
    %20 = vector.extract_strided_slice %1 {offsets = [0, 1, 0], sizes = [16, 15, 4], strides = [1, 1, 1]} : vector<16x16x4xbf16> to vector<16x15x4xbf16>
    %cst_8 = arith.constant 0.000000e+00 : bf16
    %21 = vector.broadcast %cst_8 : bf16 to vector<16x1x4xbf16>
    %22 = tpu.concatenate %20, %21 in 1 : vector<16x15x4xbf16>, vector<16x1x4xbf16> -> vector<16x16x4xbf16>
    %23 = vector.extract_strided_slice %1 {offsets = [1, 0, 0], sizes = [15, 16, 4], strides = [1, 1, 1]} : vector<16x16x4xbf16> to vector<15x16x4xbf16>
    %cst_9 = arith.constant 0.000000e+00 : bf16
    %24 = vector.broadcast %cst_9 : bf16 to vector<1x16x4xbf16>
    %25 = tpu.concatenate %23, %24 in 0 : vector<15x16x4xbf16>, vector<1x16x4xbf16> -> vector<16x16x4xbf16>
    %cst_10 = arith.constant 0.000000e+00 : bf16
    %26 = vector.broadcast %cst_10 : bf16 to vector<16x1x4xbf16>
    %27 = vector.extract_strided_slice %25 {offsets = [0, 0, 0], sizes = [16, 15, 4], strides = [1, 1, 1]} : vector<16x16x4xbf16> to vector<16x15x4xbf16>
    %28 = tpu.concatenate %26, %27 in 1 : vector<16x1x4xbf16>, vector<16x15x4xbf16> -> vector<16x16x4xbf16>
    %29 = vector.extract_strided_slice %1 {offsets = [1, 0, 0], sizes = [15, 16, 4], strides = [1, 1, 1]} : vector<16x16x4xbf16> to vector<15x16x4xbf16>
    %cst_11 = arith.constant 0.000000e+00 : bf16
    %30 = vector.broadcast %cst_11 : bf16 to vector<1x16x4xbf16>
    %31 = tpu.concatenate %29, %30 in 0 : vector<15x16x4xbf16>, vector<1x16x4xbf16> -> vector<16x16x4xbf16>
    %32 = vector.extract_strided_slice %1 {offsets = [1, 0, 0], sizes = [15, 16, 4], strides = [1, 1, 1]} : vector<16x16x4xbf16> to vector<15x16x4xbf16>
    %cst_12 = arith.constant 0.000000e+00 : bf16
    %33 = vector.broadcast %cst_12 : bf16 to vector<1x16x4xbf16>
    %34 = tpu.concatenate %32, %33 in 0 : vector<15x16x4xbf16>, vector<1x16x4xbf16> -> vector<16x16x4xbf16>
    %35 = vector.extract_strided_slice %34 {offsets = [0, 1, 0], sizes = [16, 15, 4], strides = [1, 1, 1]} : vector<16x16x4xbf16> to vector<16x15x4xbf16>
    %cst_13 = arith.constant 0.000000e+00 : bf16
    %36 = vector.broadcast %cst_13 : bf16 to vector<16x1x4xbf16>
    %37 = tpu.concatenate %35, %36 in 1 : vector<16x15x4xbf16>, vector<16x1x4xbf16> -> vector<16x16x4xbf16>
    %38 = tpu.concatenate %7, %10, %16, %19, %1, %22, %28, %31, %37 in 2 : vector<16x16x4xbf16>, vector<16x16x4xbf16>, vector<16x16x4xbf16>, vector<16x16x4xbf16>, vector<16x16x4xbf16>, vector<16x16x4xbf16>, vector<16x16x4xbf16>, vector<16x16x4xbf16>, vector<16x16x4xbf16> -> vector<16x16x36xbf16>
    %39 = vector.shape_cast %38 : vector<16x16x36xbf16> to vector<256x36xbf16>
    %c0_14 = arith.constant 0 : index
    %c0_15 = arith.constant 0 : index
    %40 = vector.load %arg2[%c0_14, %c0_15] : memref<36x8xbf16, #tpu.memory_space<vmem>>, vector<36x8xbf16>
    %cst_16 = arith.constant dense<0.000000e+00> : vector<256x8xf32>
    %41 = tpu.matmul %39, %40, %cst_16 {dimension_numbers = #tpu.dot_dimension_numbers<[1], [0], [0], [1], [0, 0, 1, 1], [], []>} : vector<256x36xbf16>, vector<36x8xbf16>, vector<256x8xf32> -> vector<256x8xf32>
    %c0_17 = arith.constant 0 : index
    %c0_18 = arith.constant 0 : index
    %42 = vector.load %arg3[%c0_17, %c0_18] : memref<1x8xf32, #tpu.memory_space<vmem>>, vector<1x8xf32>
    %43 = vector.broadcast %42 : vector<1x8xf32> to vector<256x8xf32>
    %44 = arith.mulf %41, %43 : vector<256x8xf32>
    %c0_19 = arith.constant 0 : index
    %c0_20 = arith.constant 0 : index
    %45 = vector.load %arg4[%c0_19, %c0_20] : memref<1x8xf32, #tpu.memory_space<vmem>>, vector<1x8xf32>
    %46 = vector.broadcast %45 : vector<1x8xf32> to vector<256x8xf32>
    %47 = arith.addf %44, %46 : vector<256x8xf32>
    %cst_21 = arith.constant 0.000000e+00 : f32
    %48 = vector.broadcast %cst_21 : f32 to vector<256x8xf32>
    %49 = arith.maximumf %47, %48 : vector<256x8xf32>
    %50 = arith.truncf %49 : vector<256x8xf32> to vector<256x8xbf16>
    %51 = vector.shape_cast %50 : vector<256x8xbf16> to vector<16x16x8xbf16>
    %cst_22 = arith.constant 0.000000e+00 : bf16
    %52 = vector.broadcast %cst_22 : bf16 to vector<1x16x8xbf16>
    %53 = vector.extract_strided_slice %51 {offsets = [0, 0, 0], sizes = [15, 16, 8], strides = [1, 1, 1]} : vector<16x16x8xbf16> to vector<15x16x8xbf16>
    %54 = tpu.concatenate %52, %53 in 0 : vector<1x16x8xbf16>, vector<15x16x8xbf16> -> vector<16x16x8xbf16>
    %cst_23 = arith.constant 0.000000e+00 : bf16
    %55 = vector.broadcast %cst_23 : bf16 to vector<16x1x8xbf16>
    %56 = vector.extract_strided_slice %54 {offsets = [0, 0, 0], sizes = [16, 15, 8], strides = [1, 1, 1]} : vector<16x16x8xbf16> to vector<16x15x8xbf16>
    %57 = tpu.concatenate %55, %56 in 1 : vector<16x1x8xbf16>, vector<16x15x8xbf16> -> vector<16x16x8xbf16>
    %cst_24 = arith.constant 0.000000e+00 : bf16
    %58 = vector.broadcast %cst_24 : bf16 to vector<1x16x8xbf16>
    %59 = vector.extract_strided_slice %51 {offsets = [0, 0, 0], sizes = [15, 16, 8], strides = [1, 1, 1]} : vector<16x16x8xbf16> to vector<15x16x8xbf16>
    %60 = tpu.concatenate %58, %59 in 0 : vector<1x16x8xbf16>, vector<15x16x8xbf16> -> vector<16x16x8xbf16>
    %cst_25 = arith.constant 0.000000e+00 : bf16
    %61 = vector.broadcast %cst_25 : bf16 to vector<1x16x8xbf16>
    %62 = vector.extract_strided_slice %51 {offsets = [0, 0, 0], sizes = [15, 16, 8], strides = [1, 1, 1]} : vector<16x16x8xbf16> to vector<15x16x8xbf16>
    %63 = tpu.concatenate %61, %62 in 0 : vector<1x16x8xbf16>, vector<15x16x8xbf16> -> vector<16x16x8xbf16>
    %64 = vector.extract_strided_slice %63 {offsets = [0, 1, 0], sizes = [16, 15, 8], strides = [1, 1, 1]} : vector<16x16x8xbf16> to vector<16x15x8xbf16>
    %cst_26 = arith.constant 0.000000e+00 : bf16
    %65 = vector.broadcast %cst_26 : bf16 to vector<16x1x8xbf16>
    %66 = tpu.concatenate %64, %65 in 1 : vector<16x15x8xbf16>, vector<16x1x8xbf16> -> vector<16x16x8xbf16>
    %cst_27 = arith.constant 0.000000e+00 : bf16
    %67 = vector.broadcast %cst_27 : bf16 to vector<16x1x8xbf16>
    %68 = vector.extract_strided_slice %51 {offsets = [0, 0, 0], sizes = [16, 15, 8], strides = [1, 1, 1]} : vector<16x16x8xbf16> to vector<16x15x8xbf16>
    %69 = tpu.concatenate %67, %68 in 1 : vector<16x1x8xbf16>, vector<16x15x8xbf16> -> vector<16x16x8xbf16>
    %70 = vector.extract_strided_slice %51 {offsets = [0, 1, 0], sizes = [16, 15, 8], strides = [1, 1, 1]} : vector<16x16x8xbf16> to vector<16x15x8xbf16>
    %cst_28 = arith.constant 0.000000e+00 : bf16
    %71 = vector.broadcast %cst_28 : bf16 to vector<16x1x8xbf16>
    %72 = tpu.concatenate %70, %71 in 1 : vector<16x15x8xbf16>, vector<16x1x8xbf16> -> vector<16x16x8xbf16>
    %73 = vector.extract_strided_slice %51 {offsets = [1, 0, 0], sizes = [15, 16, 8], strides = [1, 1, 1]} : vector<16x16x8xbf16> to vector<15x16x8xbf16>
    %cst_29 = arith.constant 0.000000e+00 : bf16
    %74 = vector.broadcast %cst_29 : bf16 to vector<1x16x8xbf16>
    %75 = tpu.concatenate %73, %74 in 0 : vector<15x16x8xbf16>, vector<1x16x8xbf16> -> vector<16x16x8xbf16>
    %cst_30 = arith.constant 0.000000e+00 : bf16
    %76 = vector.broadcast %cst_30 : bf16 to vector<16x1x8xbf16>
    %77 = vector.extract_strided_slice %75 {offsets = [0, 0, 0], sizes = [16, 15, 8], strides = [1, 1, 1]} : vector<16x16x8xbf16> to vector<16x15x8xbf16>
    %78 = tpu.concatenate %76, %77 in 1 : vector<16x1x8xbf16>, vector<16x15x8xbf16> -> vector<16x16x8xbf16>
    %79 = vector.extract_strided_slice %51 {offsets = [1, 0, 0], sizes = [15, 16, 8], strides = [1, 1, 1]} : vector<16x16x8xbf16> to vector<15x16x8xbf16>
    %cst_31 = arith.constant 0.000000e+00 : bf16
    %80 = vector.broadcast %cst_31 : bf16 to vector<1x16x8xbf16>
    %81 = tpu.concatenate %79, %80 in 0 : vector<15x16x8xbf16>, vector<1x16x8xbf16> -> vector<16x16x8xbf16>
    %82 = vector.extract_strided_slice %51 {offsets = [1, 0, 0], sizes = [15, 16, 8], strides = [1, 1, 1]} : vector<16x16x8xbf16> to vector<15x16x8xbf16>
    %cst_32 = arith.constant 0.000000e+00 : bf16
    %83 = vector.broadcast %cst_32 : bf16 to vector<1x16x8xbf16>
    %84 = tpu.concatenate %82, %83 in 0 : vector<15x16x8xbf16>, vector<1x16x8xbf16> -> vector<16x16x8xbf16>
    %85 = vector.extract_strided_slice %84 {offsets = [0, 1, 0], sizes = [16, 15, 8], strides = [1, 1, 1]} : vector<16x16x8xbf16> to vector<16x15x8xbf16>
    %cst_33 = arith.constant 0.000000e+00 : bf16
    %86 = vector.broadcast %cst_33 : bf16 to vector<16x1x8xbf16>
    %87 = tpu.concatenate %85, %86 in 1 : vector<16x15x8xbf16>, vector<16x1x8xbf16> -> vector<16x16x8xbf16>
    %88 = tpu.concatenate %57, %60, %66, %69, %51, %72, %78, %81, %87 in 2 : vector<16x16x8xbf16>, vector<16x16x8xbf16>, vector<16x16x8xbf16>, vector<16x16x8xbf16>, vector<16x16x8xbf16>, vector<16x16x8xbf16>, vector<16x16x8xbf16>, vector<16x16x8xbf16>, vector<16x16x8xbf16> -> vector<16x16x72xbf16>
    %89 = vector.shape_cast %88 : vector<16x16x72xbf16> to vector<256x72xbf16>
    %c0_34 = arith.constant 0 : index
    %c0_35 = arith.constant 0 : index
    %90 = vector.load %arg5[%c0_34, %c0_35] : memref<72x8xbf16, #tpu.memory_space<vmem>>, vector<72x8xbf16>
    %cst_36 = arith.constant dense<0.000000e+00> : vector<256x8xf32>
    %91 = tpu.matmul %89, %90, %cst_36 {dimension_numbers = #tpu.dot_dimension_numbers<[1], [0], [0], [1], [0, 0, 1, 1], [], []>} : vector<256x72xbf16>, vector<72x8xbf16>, vector<256x8xf32> -> vector<256x8xf32>
    %c0_37 = arith.constant 0 : index
    %c0_38 = arith.constant 0 : index
    %92 = vector.load %arg6[%c0_37, %c0_38] : memref<1x8xf32, #tpu.memory_space<vmem>>, vector<1x8xf32>
    %93 = vector.broadcast %92 : vector<1x8xf32> to vector<256x8xf32>
    %94 = arith.mulf %91, %93 : vector<256x8xf32>
    %c0_39 = arith.constant 0 : index
    %c0_40 = arith.constant 0 : index
    %95 = vector.load %arg7[%c0_39, %c0_40] : memref<1x8xf32, #tpu.memory_space<vmem>>, vector<1x8xf32>
    %96 = vector.broadcast %95 : vector<1x8xf32> to vector<256x8xf32>
    %97 = arith.addf %94, %96 : vector<256x8xf32>
    %98 = vector.shape_cast %1 : vector<16x16x4xbf16> to vector<256x4xbf16>
    %c0_41 = arith.constant 0 : index
    %c0_42 = arith.constant 0 : index
    %99 = vector.load %arg8[%c0_41, %c0_42] : memref<4x8xbf16, #tpu.memory_space<vmem>>, vector<4x8xbf16>
    %cst_43 = arith.constant dense<0.000000e+00> : vector<256x8xf32>
    %100 = tpu.matmul %98, %99, %cst_43 {dimension_numbers = #tpu.dot_dimension_numbers<[1], [0], [0], [1], [0, 0, 1, 1], [], []>} : vector<256x4xbf16>, vector<4x8xbf16>, vector<256x8xf32> -> vector<256x8xf32>
    %c0_44 = arith.constant 0 : index
    %c0_45 = arith.constant 0 : index
    %101 = vector.load %arg9[%c0_44, %c0_45] : memref<1x8xf32, #tpu.memory_space<vmem>>, vector<1x8xf32>
    %102 = vector.broadcast %101 : vector<1x8xf32> to vector<256x8xf32>
    %103 = arith.mulf %100, %102 : vector<256x8xf32>
    %c0_46 = arith.constant 0 : index
    %c0_47 = arith.constant 0 : index
    %104 = vector.load %arg10[%c0_46, %c0_47] : memref<1x8xf32, #tpu.memory_space<vmem>>, vector<1x8xf32>
    %105 = vector.broadcast %104 : vector<1x8xf32> to vector<256x8xf32>
    %106 = arith.addf %103, %105 : vector<256x8xf32>
    %107 = arith.addf %97, %106 : vector<256x8xf32>
    %cst_48 = arith.constant 0.000000e+00 : f32
    %108 = vector.broadcast %cst_48 : f32 to vector<256x8xf32>
    %109 = arith.maximumf %107, %108 : vector<256x8xf32>
    %110 = vector.shape_cast %109 : vector<256x8xf32> to vector<1x16x16x8xf32>
    %c0_49 = arith.constant 0 : index
    %c0_50 = arith.constant 0 : index
    %c0_51 = arith.constant 0 : index
    %c0_52 = arith.constant 0 : index
    %111 = vector.load %arg11[%c0_49, %c0_50, %c0_51, %c0_52] : memref<1x16x16x8xf32, #tpu.memory_space<vmem>>, vector<1x16x16x8xf32>
    tpu.vector_store %arg11[%c0_49, %c0_50, %c0_51, %c0_52], %110 {strides = array<i32>} : memref<1x16x16x8xf32, #tpu.memory_space<vmem>>, vector<1x16x16x8xf32>,
    return
  }
  func.func @transform_0(%arg0: i32) -> (i32, i32, i32, i32) {
    %c0_i32 = arith.constant 0 : i32
    %c0_i32_0 = arith.constant 0 : i32
    %c0_i32_1 = arith.constant 0 : i32
    %c0_i32_2 = arith.constant 0 : i32
    return %arg0, %c0_i32, %c0_i32_0, %c0_i32_1 : i32, i32, i32, i32
  }
  func.func @transform_1(%arg0: i32) -> (i32, i32) {
    %c0_i32 = arith.constant 0 : i32
    %c0_i32_0 = arith.constant 0 : i32
    %c0_i32_1 = arith.constant 0 : i32
    return %c0_i32, %c0_i32_0 : i32, i32
  }
  func.func @transform_2(%arg0: i32) -> (i32, i32) {
    %c0_i32 = arith.constant 0 : i32
    %c0_i32_0 = arith.constant 0 : i32
    %c0_i32_1 = arith.constant 0 : i32
    return %c0_i32, %c0_i32_0 : i32, i32
  }
  func.func @transform_3(%arg0: i32) -> (i32, i32) {
    %c0_i32 = arith.constant 0 : i32
    %c0_i32_0 = arith.constant 0 : i32
    %c0_i32_1 = arith.constant 0 : i32
    return %c0_i32, %c0_i32_0 : i32, i32
  }
  func.func @transform_4(%arg0: i32) -> (i32, i32) {
    %c0_i32 = arith.constant 0 : i32
    %c0_i32_0 = arith.constant 0 : i32
    %c0_i32_1 = arith.constant 0 : i32
    return %c0_i32, %c0_i32_0 : i32, i32
  }
  func.func @transform_5(%arg0: i32) -> (i32, i32) {
    %c0_i32 = arith.constant 0 : i32
    %c0_i32_0 = arith.constant 0 : i32
    %c0_i32_1 = arith.constant 0 : i32
    return %c0_i32, %c0_i32_0 : i32, i32
  }
  func.func @transform_6(%arg0: i32) -> (i32, i32) {
    %c0_i32 = arith.constant 0 : i32
    %c0_i32_0 = arith.constant 0 : i32
    %c0_i32_1 = arith.constant 0 : i32
    return %c0_i32, %c0_i32_0 : i32, i32
  }
  func.func @transform_7(%arg0: i32) -> (i32, i32) {
    %c0_i32 = arith.constant 0 : i32
    %c0_i32_0 = arith.constant 0 : i32
    %c0_i32_1 = arith.constant 0 : i32
    return %c0_i32, %c0_i32_0 : i32, i32
  }
  func.func @transform_8(%arg0: i32) -> (i32, i32) {
    %c0_i32 = arith.constant 0 : i32
    %c0_i32_0 = arith.constant 0 : i32
    %c0_i32_1 = arith.constant 0 : i32
    return %c0_i32, %c0_i32_0 : i32, i32
  }
  func.func @transform_9(%arg0: i32) -> (i32, i32) {
    %c0_i32 = arith.constant 0 : i32
    %c0_i32_0 = arith.constant 0 : i32
    %c0_i32_1 = arith.constant 0 : i32
    return %c0_i32, %c0_i32_0 : i32, i32
  }
  func.func @transform_10(%arg0: i32) -> (i32, i32, i32, i32) {
    %c0_i32 = arith.constant 0 : i32
    %c0_i32_0 = arith.constant 0 : i32
    %c0_i32_1 = arith.constant 0 : i32
    %c0_i32_2 = arith.constant 0 : i32
    return %arg0, %c0_i32, %c0_i32_0, %c0_i32_1 : i32, i32, i32, i32
  }
}

</mosaic_0001>

<llo_original>
// kernel: tpu_custom_call.1
$region0: #{tpu_custom_call.1}
  #allocation0 [shape = 'u32[]', space=smem, size = 0x4, offset = 0x4, fixed_abs, tag = 'smem constant byte address 0x4 - core index']
  #allocation1 [shape = 'u32[72,128]{1,0:T(1,128)}', space=vmem, size = 0x9000, scoped, tag = 'internal scratch']
  %s0 = inlined_call_operand.vmem [shape: bf16[2,16,16,4], index: 0, kind: input, shape index: {}]
  %s1 = inlined_call_operand.vmem [shape: bf16[36,8], index: 1, kind: input, shape index: {}]
  %s2 = inlined_call_operand.vmem [shape: f32[1,8], index: 2, kind: input, shape index: {}]
  %s3 = inlined_call_operand.vmem [shape: f32[1,8], index: 3, kind: input, shape index: {}]
  %s4 = inlined_call_operand.vmem [shape: bf16[72,8], index: 4, kind: input, shape index: {}]
  %s5 = inlined_call_operand.vmem [shape: f32[1,8], index: 5, kind: input, shape index: {}]
  %s6 = inlined_call_operand.vmem [shape: f32[1,8], index: 6, kind: input, shape index: {}]
  %s7 = inlined_call_operand.vmem [shape: bf16[4,8], index: 7, kind: input, shape index: {}]
  %s8 = inlined_call_operand.vmem [shape: f32[1,8], index: 8, kind: input, shape index: {}]
  %s9 = inlined_call_operand.vmem [shape: f32[1,8], index: 9, kind: input, shape index: {}]
  %s10 = inlined_call_operand.vmem [shape: f32[2,16,16,8], index: 10, kind: output, shape index: {}]
  %s11 = sld [smem:[#allocation0]]
  $region73: #{tpu_custom_call.1} parent=0
    _
  %s13 = ssub.s32 1, %s11
  %s14 = scalar_select 0, %s13, %s11
  loop: start=0, step=1, limit=4
  $region2: #{tpu_custom_call.1} parent=0 // loop_pre_header
    _
  $region3: #{tpu_custom_call.1} parent=0 // loop_header
    %s16 = sphi 0, %s20
    %p17 = scmp.ge.s32.totalorder %s16, 4
    %s26 = sphi 0, %s28
    %s29 = sphi 0, %s26
    %s30 = sphi 0, %s29
    %s46 = sphi 0, %s30
    %s50 = sphi 0, %s50
    %s52 = sphi 0, %s50
    %s53 = sphi 0, %s52
    %s67 = sphi 0, %s53
    %s71 = sphi 0, %s71
    %s73 = sphi 0, %s71
    %s74 = sphi 0, %s73
    %s88 = sphi 0, %s74
    %s92 = sphi 0, %s92
    %s94 = sphi 0, %s92
    %s95 = sphi 0, %s94
    %s109 = sphi 0, %s95
    %s113 = sphi 0, %s113
    %s115 = sphi 0, %s113
    %s116 = sphi 0, %s115
    %s130 = sphi 0, %s116
    %s134 = sphi 0, %s134
    %s136 = sphi 0, %s134
    %s137 = sphi 0, %s136
    %s151 = sphi 0, %s137
    %s155 = sphi 0, %s155
    %s157 = sphi 0, %s155
    %s158 = sphi 0, %s157
    %s172 = sphi 0, %s158
    %s176 = sphi 0, %s176
    %s178 = sphi 0, %s176
    %s179 = sphi 0, %s178
    %s193 = sphi 0, %s179
    %s197 = sphi 0, %s197
    %s199 = sphi 0, %s197
    %s200 = sphi 0, %s199
    %s214 = sphi 0, %s200
    %s218 = sphi 0, %s218
    %s220 = sphi 0, %s218
    %s221 = sphi 0, %s220
    %s235 = sphi 0, %s221
    %s241 = sphi 0, %s243
    %s244 = sphi 0, %s241
    %s245 = sphi 0, %s244
    %s261 = sphi 0, %s245
  $region4: #{tpu_custom_call.1} parent=0 // loop_header_branch
    %19 = sbr.rel (%p17) target = $region8
  $region5: #{tpu_custom_call.1} parent=0 // loop_body
    %s21 = ssub.s32 %s16, 1
    %s22 = ssub.s32 %s16, 2
    %s23 = sadd.s32 %s16, 1
    %s24 = ssub.s32 %s16, %s23
    %p25 = scmp.eq.s32.totalorder %s24, 0
    %s27 = sadd.s32 %s26, 1
    %s28 = scalar_select %p25, %s26, %s27
    %p31 = pneg %p25
    %p32 = scmp.eq.s32.totalorder %s16, 1
    %p33 = por %p31, %p32
    %p34 = scmp.ne.s32.totalorder %s26, %s29
    %p35 = scmp.eq.s32.totalorder %s16, 0
    %p36 = por %p34, %p35
    %p37 = scmp.ne.s32.totalorder %s26, %s29
    %p38 = scmp.eq.s32.totalorder %s21, 1
    %p39 = por %p37, %p38
    %p40 = scmp.ne.s32.totalorder %s29, %s30
    %p41 = scmp.eq.s32.totalorder %s21, 0
    %p42 = por %p40, %p41
    %p43 = scmp.ne.s32.totalorder %s29, %s30
    %p44 = scmp.eq.s32.totalorder %s22, 1
    %p45 = por %p43, %p44
    %p47 = scmp.ne.s32.totalorder %s30, %s46
    %p48 = scmp.eq.s32.totalorder %s22, 0
    %p49 = por %p47, %p48
    %s51 = sadd.s32 %s50, 1
    %p54 = scmp.eq.s32.totalorder %s16, 1
    %p55 = scmp.ne.s32.totalorder %s50, %s52
    %p56 = scmp.eq.s32.totalorder %s16, 0
    %p57 = por %p55, %p56
    %p58 = scmp.ne.s32.totalorder %s50, %s52
    %p59 = scmp.eq.s32.totalorder %s21, 1
    %p60 = por %p58, %p59
    %p61 = scmp.ne.s32.totalorder %s52, %s53
    %p62 = scmp.eq.s32.totalorder %s21, 0
    %p63 = por %p61, %p62
    %p64 = scmp.ne.s32.totalorder %s52, %s53
    %p65 = scmp.eq.s32.totalorder %s22, 1
    %p66 = por %p64, %p65
    %p68 = scmp.ne.s32.totalorder %s53, %s67
    %p69 = scmp.eq.s32.totalorder %s22, 0
    %p70 = por %p68, %p69
    %s72 = sadd.s32 %s71, 1
    %p75 = scmp.eq.s32.totalorder %s16, 1
    %p76 = scmp.ne.s32.totalorder %s71, %s73
    %p77 = scmp.eq.s32.totalorder %s16, 0
    %p78 = por %p76, %p77
    %p79 = scmp.ne.s32.totalorder %s71, %s73
    %p80 = scmp.eq.s32.totalorder %s21, 1
    %p81 = por %p79, %p80
    %p82 = scmp.ne.s32.totalorder %s73, %s74
    %p83 = scmp.eq.s32.totalorder %s21, 0
    %p84 = por %p82, %p83
    %p85 = scmp.ne.s32.totalorder %s73, %s74
    %p86 = scmp.eq.s32.totalorder %s22, 1
    %p87 = por %p85, %p86
    %p89 = scmp.ne.s32.totalorder %s74, %s88
    %p90 = scmp.eq.s32.totalorder %s22, 0
    %p91 = por %p89, %p90
    %s93 = sadd.s32 %s92, 1
    %p96 = scmp.eq.s32.totalorder %s16, 1
    %p97 = scmp.ne.s32.totalorder %s92, %s94
    %p98 = scmp.eq.s32.totalorder %s16, 0
    %p99 = por %p97, %p98
    %p100 = scmp.ne.s32.totalorder %s92, %s94
    %p101 = scmp.eq.s32.totalorder %s21, 1
    %p102 = por %p100, %p101
    %p103 = scmp.ne.s32.totalorder %s94, %s95
    %p104 = scmp.eq.s32.totalorder %s21, 0
    %p105 = por %p103, %p104
    %p106 = scmp.ne.s32.totalorder %s94, %s95
    %p107 = scmp.eq.s32.totalorder %s22, 1
    %p108 = por %p106, %p107
    %p110 = scmp.ne.s32.totalorder %s95, %s109
    %p111 = scmp.eq.s32.totalorder %s22, 0
    %p112 = por %p110, %p111
    %s114 = sadd.s32 %s113, 1
    %p117 = scmp.eq.s32.totalorder %s16, 1
    %p118 = scmp.ne.s32.totalorder %s113, %s115
    %p119 = scmp.eq.s32.totalorder %s16, 0
    %p120 = por %p118, %p119
    %p121 = scmp.ne.s32.totalorder %s113, %s115
    %p122 = scmp.eq.s32.totalorder %s21, 1
    %p123 = por %p121, %p122
    %p124 = scmp.ne.s32.totalorder %s115, %s116
    %p125 = scmp.eq.s32.totalorder %s21, 0
    %p126 = por %p124, %p125
    %p127 = scmp.ne.s32.totalorder %s115, %s116
    %p128 = scmp.eq.s32.totalorder %s22, 1
    %p129 = por %p127, %p128
    %p131 = scmp.ne.s32.totalorder %s116, %s130
    %p132 = scmp.eq.s32.totalorder %s22, 0
    %p133 = por %p131, %p132
    %s135 = sadd.s32 %s134, 1
    %p138 = scmp.eq.s32.totalorder %s16, 1
    %p139 = scmp.ne.s32.totalorder %s134, %s136
    %p140 = scmp.eq.s32.totalorder %s16, 0
    %p141 = por %p139, %p140
    %p142 = scmp.ne.s32.totalorder %s134, %s136
    %p143 = scmp.eq.s32.totalorder %s21, 1
    %p144 = por %p142, %p143
    %p145 = scmp.ne.s32.totalorder %s136, %s137
    %p146 = scmp.eq.s32.totalorder %s21, 0
    %p147 = por %p145, %p146
    %p148 = scmp.ne.s32.totalorder %s136, %s137
    %p149 = scmp.eq.s32.totalorder %s22, 1
    %p150 = por %p148, %p149
    %p152 = scmp.ne.s32.totalorder %s137, %s151
    %p153 = scmp.eq.s32.totalorder %s22, 0
    %p154 = por %p152, %p153
    %s156 = sadd.s32 %s155, 1
    %p159 = scmp.eq.s32.totalorder %s16, 1
    %p160 = scmp.ne.s32.totalorder %s155, %s157
    %p161 = scmp.eq.s32.totalorder %s16, 0
    %p162 = por %p160, %p161
    %p163 = scmp.ne.s32.totalorder %s155, %s157
    %p164 = scmp.eq.s32.totalorder %s21, 1
    %p165 = por %p163, %p164
    %p166 = scmp.ne.s32.totalorder %s157, %s158
    %p167 = scmp.eq.s32.totalorder %s21, 0
    %p168 = por %p166, %p167
    %p169 = scmp.ne.s32.totalorder %s157, %s158
    %p170 = scmp.eq.s32.totalorder %s22, 1
    %p171 = por %p169, %p170
    %p173 = scmp.ne.s32.totalorder %s158, %s172
    %p174 = scmp.eq.s32.totalorder %s22, 0
    %p175 = por %p173, %p174
    %s177 = sadd.s32 %s176, 1
    %p180 = scmp.eq.s32.totalorder %s16, 1
    %p181 = scmp.ne.s32.totalorder %s176, %s178
    %p182 = scmp.eq.s32.totalorder %s16, 0
    %p183 = por %p181, %p182
    %p184 = scmp.ne.s32.totalorder %s176, %s178
    %p185 = scmp.eq.s32.totalorder %s21, 1
    %p186 = por %p184, %p185
    %p187 = scmp.ne.s32.totalorder %s178, %s179
    %p188 = scmp.eq.s32.totalorder %s21, 0
    %p189 = por %p187, %p188
    %p190 = scmp.ne.s32.totalorder %s178, %s179
    %p191 = scmp.eq.s32.totalorder %s22, 1
    %p192 = por %p190, %p191
    %p194 = scmp.ne.s32.totalorder %s179, %s193
    %p195 = scmp.eq.s32.totalorder %s22, 0
    %p196 = por %p194, %p195
    %s198 = sadd.s32 %s197, 1
    %p201 = scmp.eq.s32.totalorder %s16, 1
    %p202 = scmp.ne.s32.totalorder %s197, %s199
    %p203 = scmp.eq.s32.totalorder %s16, 0
    %p204 = por %p202, %p203
    %p205 = scmp.ne.s32.totalorder %s197, %s199
    %p206 = scmp.eq.s32.totalorder %s21, 1
    %p207 = por %p205, %p206
    %p208 = scmp.ne.s32.totalorder %s199, %s200
    %p209 = scmp.eq.s32.totalorder %s21, 0
    %p210 = por %p208, %p209
    %p211 = scmp.ne.s32.totalorder %s199, %s200
    %p212 = scmp.eq.s32.totalorder %s22, 1
    %p213 = por %p211, %p212
    %p215 = scmp.ne.s32.totalorder %s200, %s214
    %p216 = scmp.eq.s32.totalorder %s22, 0
    %p217 = por %p215, %p216
    %s219 = sadd.s32 %s218, 1
    %p222 = scmp.eq.s32.totalorder %s16, 1
    %p223 = scmp.ne.s32.totalorder %s218, %s220
    %p224 = scmp.eq.s32.totalorder %s16, 0
    %p225 = por %p223, %p224
    %p226 = scmp.ne.s32.totalorder %s218, %s220
    %p227 = scmp.eq.s32.totalorder %s21, 1
    %p228 = por %p226, %p227
    %p229 = scmp.ne.s32.totalorder %s220, %s221
    %p230 = scmp.eq.s32.totalorder %s21, 0
    %p231 = por %p229, %p230
    %p232 = scmp.ne.s32.totalorder %s220, %s221
    %p233 = scmp.eq.s32.totalorder %s22, 1
    %p234 = por %p232, %p233
    %p236 = scmp.ne.s32.totalorder %s221, %s235
    %p237 = scmp.eq.s32.totalorder %s22, 0
    %p238 = por %p236, %p237
    %s239 = ssub.s32 %s16, %s23
    %p240 = scmp.eq.s32.totalorder %s239, 0
    %s242 = sadd.s32 %s241, 1
    %s243 = scalar_select %p240, %s241, %s242
    %p246 = pneg %p240
    %p247 = scmp.eq.s32.totalorder %s16, 1
    %p248 = por %p246, %p247
    %p249 = scmp.ne.s32.totalorder %s241, %s244
    %p250 = scmp.eq.s32.totalorder %s16, 0
    %p251 = por %p249, %p250
    %p252 = scmp.ne.s32.totalorder %s241, %s244
    %p253 = scmp.eq.s32.totalorder %s21, 1
    %p254 = por %p252, %p253
    %p255 = scmp.ne.s32.totalorder %s244, %s245
    %p256 = scmp.eq.s32.totalorder %s21, 0
    %p257 = por %p255, %p256
    %p258 = scmp.ne.s32.totalorder %s244, %s245
    %p259 = scmp.eq.s32.totalorder %s22, 1
    %p260 = por %p258, %p259
    %p262 = scmp.ne.s32.totalorder %s245, %s261
    %p263 = scmp.eq.s32.totalorder %s22, 0
    %p264 = por %p262, %p263
    %p265 = scmp.le.s32.totalorder 1, %s16
    %p266 = scmp.lt.s32.totalorder %s16, 3
    %p267 = pnand %p265, %p266
    %p268 = pneg %p267
    // Predicated region
    $region9: #{tpu_custom_call.1} parent=5 // pred_check
      _
    $region10: #{tpu_custom_call.1} parent=5 // pred_check_branch
      %270 = sbr.rel (%p267) target = $region12
    $region11: #{tpu_custom_call.1} parent=5 // pred_region
      %s271 = ssub.s32 %s16, 1
      // Predicated region
      $region13: #{tpu_custom_call.1} parent=11 // pred_check
        %p272 = pneg %p63
      $region14: #{tpu_custom_call.1} parent=11 // pred_check_branch
        %274 = sbr.rel (%p272) target = $region16
      $region15: #{tpu_custom_call.1} parent=11 // pred_region
        _
      $region16: #{tpu_custom_call.1} parent=11 // pred_fallthru
        _
      // Predicated region
      $region17: #{tpu_custom_call.1} parent=11 // pred_check
        %p275 = pneg %p84
      $region18: #{tpu_custom_call.1} parent=11 // pred_check_branch
        %277 = sbr.rel (%p275) target = $region20
      $region19: #{tpu_custom_call.1} parent=11 // pred_region
        _
      $region20: #{tpu_custom_call.1} parent=11 // pred_fallthru
        _
      // Predicated region
      $region21: #{tpu_custom_call.1} parent=11 // pred_check
        %p278 = pneg %p105
      $region22: #{tpu_custom_call.1} parent=11 // pred_check_branch
        %280 = sbr.rel (%p278) target = $region24
      $region23: #{tpu_custom_call.1} parent=11 // pred_region
        _
      $region24: #{tpu_custom_call.1} parent=11 // pred_fallthru
        _
      // Predicated region
      $region25: #{tpu_custom_call.1} parent=11 // pred_check
        %p281 = pneg %p126
      $region26: #{tpu_custom_call.1} parent=11 // pred_check_branch
        %283 = sbr.rel (%p281) target = $region28
      $region27: #{tpu_custom_call.1} parent=11 // pred_region
        _
      $region28: #{tpu_custom_call.1} parent=11 // pred_fallthru
        _
      // Predicated region
      $region29: #{tpu_custom_call.1} parent=11 // pred_check
        %p284 = pneg %p147
      $region30: #{tpu_custom_call.1} parent=11 // pred_check_branch
        %286 = sbr.rel (%p284) target = $region32
      $region31: #{tpu_custom_call.1} parent=11 // pred_region
        _
      $region32: #{tpu_custom_call.1} parent=11 // pred_fallthru
        _
      // Predicated region
      $region33: #{tpu_custom_call.1} parent=11 // pred_check
        %p287 = pneg %p168
      $region34: #{tpu_custom_call.1} parent=11 // pred_check_branch
        %289 = sbr.rel (%p287) target = $region36
      $region35: #{tpu_custom_call.1} parent=11 // pred_region
        _
      $region36: #{tpu_custom_call.1} parent=11 // pred_fallthru
        _
      // Predicated region
      $region37: #{tpu_custom_call.1} parent=11 // pred_check
        %p290 = pneg %p189
      $region38: #{tpu_custom_call.1} parent=11 // pred_check_branch
        %292 = sbr.rel (%p290) target = $region40
      $region39: #{tpu_custom_call.1} parent=11 // pred_region
        _
      $region40: #{tpu_custom_call.1} parent=11 // pred_fallthru
        _
      // Predicated region
      $region41: #{tpu_custom_call.1} parent=11 // pred_check
        %p293 = pneg %p210
      $region42: #{tpu_custom_call.1} parent=11 // pred_check_branch
        %295 = sbr.rel (%p293) target = $region44
      $region43: #{tpu_custom_call.1} parent=11 // pred_region
        _
      $region44: #{tpu_custom_call.1} parent=11 // pred_fallthru
        _
      // Predicated region
      $region45: #{tpu_custom_call.1} parent=11 // pred_check
        %p296 = pneg %p231
      $region46: #{tpu_custom_call.1} parent=11 // pred_check_branch
        %298 = sbr.rel (%p296) target = $region48
      $region47: #{tpu_custom_call.1} parent=11 // pred_region
        _
      $region48: #{tpu_custom_call.1} parent=11 // pred_fallthru
        _
    $region12: #{tpu_custom_call.1} parent=5 // pred_fallthru
      _
    %p299 = scmp.lt.s32.totalorder %s16, 2
    // Predicated region
    $region49: #{tpu_custom_call.1} parent=5 // pred_check
      %p300 = pneg %p299
    $region50: #{tpu_custom_call.1} parent=5 // pred_check_branch
      %302 = sbr.rel (%p300) target = $region52
    $region51: #{tpu_custom_call.1} parent=5 // pred_region
      // Predicated region
      $region53: #{tpu_custom_call.1} parent=51 // pred_check
        %p303 = pneg %p36
      $region54: #{tpu_custom_call.1} parent=51 // pred_check_branch
        %305 = sbr.rel (%p303) target = $region56
      $region55: #{tpu_custom_call.1} parent=51 // pred_region
        %p306 = scmp.lt.s32.totalorder %s16, 1
        %s307 = scalar_select %p306, %s16, 1
        %s308 = smul.addr %s307, 32
        %s309 = smul.addr %s308, 4
        %s310 = scalar_lea.vmem %s0, %s309
      $region56: #{tpu_custom_call.1} parent=51 // pred_fallthru
        _
    $region52: #{tpu_custom_call.1} parent=5 // pred_fallthru
      _
    %p311 = scmp.le.s32.totalorder 1, %s16
    %p312 = scmp.lt.s32.totalorder %s16, 3
    %p313 = pnand %p311, %p312
    %p314 = pneg %p313
    // Predicated region
    $region57: #{tpu_custom_call.1} parent=5 // pred_check
      _
    $region58: #{tpu_custom_call.1} parent=5 // pred_check_branch
      %316 = sbr.rel (%p313) target = $region60
    $region59: #{tpu_custom_call.1} parent=5 // pred_region
      %s317 = ssub.s32 %s16, 1
      %p318 = scmp.lt.s32.totalorder %s21, 1
      %s319 = scalar_select %p318, %s21, 1
      %s320 = smul.addr %s319, 32
      %s321 = smul.addr %s320, 4
      %s322 = scalar_lea.vmem %s0, %s321
      %p323 = pneg %p42
      %p324 = pneg %p39
      %p325 = pneg %p63
      %p326 = pneg %p60
      %p327 = pneg %p84
      %p328 = pneg %p81
      %p329 = pneg %p105
      %p330 = pneg %p102
      %p331 = pneg %p126
      %p332 = pneg %p123
      %p333 = pneg %p147
      %p334 = pneg %p144
      %p335 = pneg %p168
      %p336 = pneg %p165
      %p337 = pneg %p189
      %p338 = pneg %p186
      %p339 = pneg %p210
      %p340 = pneg %p207
      %p341 = pneg %p231
      %p342 = pneg %p228
      %p343 = pneg %p257
      %p344 = pneg %p254
      %p345 = scmp.lt.s32.totalorder %s21, 1
      %s346 = scalar_select %p345, %s21, 1
      %s347 = smul.addr %s346, 32
      %s348 = smul.addr %s347, 8
      %s349 = scalar_lea.vmem %s10, %s348
      %p350 = scmp.lt.s32.totalorder %s21, 1
      %s351 = scalar_select %p350, %s21, 1
      %s352 = smul.addr %s351, 32
      %s353 = smul.addr %s352, 4
      %s354 = scalar_lea.vmem %s0, %s353
      %p355 = scmp.lt.s32.totalorder %s21, 1
      %s356 = scalar_select %p355, %s21, 1
      %s357 = smul.addr %s356, 32
      %s358 = smul.addr %s357, 8
      %s359 = scalar_lea.vmem %s10, %s358
      %v361 = vld [vmem:[%s354] sm:$0xf]
      %v362 = vld [vmem:[%s354 + $0x4] sm:$0xf]
      %v363 = vld [vmem:[%s354 + $0x8] sm:$0xf]
      %v364 = vld [vmem:[%s354 + $0xc] sm:$0xf]
      %v365 = vld [vmem:[%s354 + $0x10] sm:$0xf]
      %v366 = vld [vmem:[%s354 + $0x14] sm:$0xf]
      %v367 = vld [vmem:[%s354 + $0x18] sm:$0xf]
      %v368 = vld [vmem:[%s354 + $0x1c] sm:$0xf]
      %v369 = vld [vmem:[%s354 + $0x20] sm:$0xf]
      %v370 = vld [vmem:[%s354 + $0x24] sm:$0xf]
      %v371 = vld [vmem:[%s354 + $0x28] sm:$0xf]
      %v372 = vld [vmem:[%s354 + $0x2c] sm:$0xf]
      %v373 = vld [vmem:[%s354 + $0x30] sm:$0xf]
      %v374 = vld [vmem:[%s354 + $0x34] sm:$0xf]
      %v375 = vld [vmem:[%s354 + $0x38] sm:$0xf]
      %v376 = vld [vmem:[%s354 + $0x3c] sm:$0xf]
      %v377 = vld [vmem:[%s354 + $0x40] sm:$0xf]
      %v378 = vld [vmem:[%s354 + $0x44] sm:$0xf]
      %v379 = vld [vmem:[%s354 + $0x48] sm:$0xf]
      %v380 = vld [vmem:[%s354 + $0x4c] sm:$0xf]
      %v381 = vld [vmem:[%s354 + $0x50] sm:$0xf]
      %v382 = vld [vmem:[%s354 + $0x54] sm:$0xf]
      %v383 = vld [vmem:[%s354 + $0x58] sm:$0xf]
      %v384 = vld [vmem:[%s354 + $0x5c] sm:$0xf]
      %v385 = vld [vmem:[%s354 + $0x60] sm:$0xf]
      %v386 = vld [vmem:[%s354 + $0x64] sm:$0xf]
      %v387 = vld [vmem:[%s354 + $0x68] sm:$0xf]
      %v388 = vld [vmem:[%s354 + $0x6c] sm:$0xf]
      %v389 = vld [vmem:[%s354 + $0x70] sm:$0xf]
      %v390 = vld [vmem:[%s354 + $0x74] sm:$0xf]
      %v391 = vld [vmem:[%s354 + $0x78] sm:$0xf]
      %v392 = vld [vmem:[%s354 + $0x7c] sm:$0xf]
      %v423 = vunpack.c.l.b16 %v361
      %v424 = vunpack.c.l.b16 %v362
      %v425 = vunpack.c.l.b16 %v363
      %v426 = vunpack.c.l.b16 %v364
      %v427 = vunpack.c.l.b16 %v365
      %v428 = vunpack.c.l.b16 %v366
      %v429 = vunpack.c.l.b16 %v367
      %v430 = vunpack.c.l.b16 %v368
      %v431 = vunpack.c.l.b16 %v369
      %v432 = vunpack.c.l.b16 %v370
      %v433 = vunpack.c.l.b16 %v371
      %v434 = vunpack.c.l.b16 %v372
      %v435 = vunpack.c.l.b16 %v373
      %v436 = vunpack.c.l.b16 %v374
      %v437 = vunpack.c.l.b16 %v375
      %v438 = vunpack.c.l.b16 %v376
      %v439 = vunpack.c.l.b16 %v377
      %v440 = vunpack.c.l.b16 %v378
      %v441 = vunpack.c.l.b16 %v379
      %v442 = vunpack.c.l.b16 %v380
      %v443 = vunpack.c.l.b16 %v381
      %v444 = vunpack.c.l.b16 %v382
      %v445 = vunpack.c.l.b16 %v383
      %v446 = vunpack.c.l.b16 %v384
      %v447 = vunpack.c.l.b16 %v385
      %v448 = vunpack.c.l.b16 %v386
      %v449 = vunpack.c.l.b16 %v387
      %v450 = vunpack.c.l.b16 %v388
      %v451 = vunpack.c.l.b16 %v389
      %v452 = vunpack.c.l.b16 %v390
      %v453 = vpack.c.b16 %v424, %v423
      %v454 = vpack.c.b16 %v426, %v425
      %v455 = vpack.c.b16 %v428, %v427
      %v456 = vpack.c.b16 %v430, %v429
      %v457 = vpack.c.b16 %v432, %v431
      %v458 = vpack.c.b16 %v434, %v433
      %v459 = vpack.c.b16 %v436, %v435
      %v460 = vpack.c.b16 %v438, %v437
      %v461 = vpack.c.b16 %v440, %v439
      %v462 = vpack.c.b16 %v442, %v441
      %v463 = vpack.c.b16 %v444, %v443
      %v464 = vpack.c.b16 %v446, %v445
      %v465 = vpack.c.b16 %v448, %v447
      %v466 = vpack.c.b16 %v450, %v449
      %v467 = vpack.c.b16 %v452, %v451
      %v469 = vshrl.u32 0, 16
      %v471 = vrot.slane %v469, 7
      %v472 = vshll.u32 0, 16
      %v474 = vor.u32 %v471, %v472
      %v476 = vshrl.u32 %v453, 16
      %v478 = vrot.slane %v476, 7
      %v479 = vshll.u32 %v453, 16
      %v481 = vor.u32 %v478, %v479
      %v483 = vshrl.u32 %v454, 16
      %v485 = vrot.slane %v483, 7
      %v486 = vshll.u32 %v454, 16
      %v488 = vor.u32 %v485, %v486
      %v490 = vshrl.u32 %v455, 16
      %v492 = vrot.slane %v490, 7
      %v493 = vshll.u32 %v455, 16
      %v495 = vor.u32 %v492, %v493
      %v497 = vshrl.u32 %v456, 16
      %v499 = vrot.slane %v497, 7
      %v500 = vshll.u32 %v456, 16
      %v502 = vor.u32 %v499, %v500
      %v504 = vshrl.u32 %v457, 16
      %v506 = vrot.slane %v504, 7
      %v507 = vshll.u32 %v457, 16
      %v509 = vor.u32 %v506, %v507
      %v511 = vshrl.u32 %v458, 16
      %v513 = vrot.slane %v511, 7
      %v514 = vshll.u32 %v458, 16
      %v516 = vor.u32 %v513, %v514
      %v518 = vshrl.u32 %v459, 16
      %v520 = vrot.slane %v518, 7
      %v521 = vshll.u32 %v459, 16
      %v523 = vor.u32 %v520, %v521
      %v525 = vshrl.u32 %v460, 16
      %v527 = vrot.slane %v525, 7
      %v528 = vshll.u32 %v460, 16
      %v530 = vor.u32 %v527, %v528
      %v532 = vshrl.u32 %v461, 16
      %v534 = vrot.slane %v532, 7
      %v535 = vshll.u32 %v461, 16
      %v537 = vor.u32 %v534, %v535
      %v539 = vshrl.u32 %v462, 16
      %v541 = vrot.slane %v539, 7
      %v542 = vshll.u32 %v462, 16
      %v544 = vor.u32 %v541, %v542
      %v546 = vshrl.u32 %v463, 16
      %v548 = vrot.slane %v546, 7
      %v549 = vshll.u32 %v463, 16
      %v551 = vor.u32 %v548, %v549
      %v553 = vshrl.u32 %v464, 16
      %v555 = vrot.slane %v553, 7
      %v556 = vshll.u32 %v464, 16
      %v558 = vor.u32 %v555, %v556
      %v560 = vshrl.u32 %v465, 16
      %v562 = vrot.slane %v560, 7
      %v563 = vshll.u32 %v465, 16
      %v565 = vor.u32 %v562, %v563
      %v567 = vshrl.u32 %v466, 16
      %v569 = vrot.slane %v567, 7
      %v570 = vshll.u32 %v466, 16
      %v572 = vor.u32 %v569, %v570
      %v574 = vshrl.u32 %v467, 16
      %v576 = vrot.slane %v574, 7
      %v577 = vshll.u32 %v467, 16
      %v579 = vor.u32 %v576, %v577
      %vm596 = vcmask 1040384
      %vm597 = vsmask.f32 256
      %vm598 = vmand %vm596, %vm597
      %v599 = vsel %vm598, 0, %v474
      %v600 = vsel %vm598, 0, %v481
      %v601 = vsel %vm598, 0, %v488
      %v602 = vsel %vm598, 0, %v495
      %v603 = vsel %vm598, 0, %v502
      %v604 = vsel %vm598, 0, %v509
      %v605 = vsel %vm598, 0, %v516
      %v606 = vsel %vm598, 0, %v523
      %v607 = vsel %vm598, 0, %v530
      %v608 = vsel %vm598, 0, %v537
      %v609 = vsel %vm598, 0, %v544
      %v610 = vsel %vm598, 0, %v551
      %v611 = vsel %vm598, 0, %v558
      %v612 = vsel %vm598, 0, %v565
      %v613 = vsel %vm598, 0, %v572
      %v614 = vsel %vm598, 0, %v579
      %v615 = vrot.slane %v472, 1
      %v616 = vor.u32 %v469, %v615
      %v617 = vrot.slane %v479, 1
      %v618 = vor.u32 %v476, %v617
      %v619 = vrot.slane %v486, 1
      %v620 = vor.u32 %v483, %v619
      %v621 = vrot.slane %v493, 1
      %v622 = vor.u32 %v490, %v621
      %v623 = vrot.slane %v500, 1
      %v624 = vor.u32 %v497, %v623
      %v625 = vrot.slane %v507, 1
      %v626 = vor.u32 %v504, %v625
      %v627 = vrot.slane %v514, 1
      %v628 = vor.u32 %v511, %v627
      %v629 = vrot.slane %v521, 1
      %v630 = vor.u32 %v518, %v629
      %v631 = vrot.slane %v528, 1
      %v632 = vor.u32 %v525, %v631
      %v633 = vrot.slane %v535, 1
      %v634 = vor.u32 %v532, %v633
      %v635 = vrot.slane %v542, 1
      %v636 = vor.u32 %v539, %v635
      %v637 = vrot.slane %v549, 1
      %v638 = vor.u32 %v546, %v637
      %v639 = vrot.slane %v556, 1
      %v640 = vor.u32 %v553, %v639
      %v641 = vrot.slane %v563, 1
      %v642 = vor.u32 %v560, %v641
      %v643 = vrot.slane %v570, 1
      %v644 = vor.u32 %v567, %v643
      %v645 = vrot.slane %v577, 1
      %v646 = vor.u32 %v574, %v645
      %vm663 = vcmask 1047552
      %vm664 = vsmask.f32 7424
      %vm665 = vmand %vm663, %vm664
      %v666 = vsel %vm665, %v616, 0
      %v667 = vsel %vm665, %v618, 0
      %v668 = vsel %vm665, %v620, 0
      %v669 = vsel %vm665, %v622, 0
      %v670 = vsel %vm665, %v624, 0
      %v671 = vsel %vm665, %v626, 0
      %v672 = vsel %vm665, %v628, 0
      %v673 = vsel %vm665, %v630, 0
      %v674 = vsel %vm665, %v632, 0
      %v675 = vsel %vm665, %v634, 0
      %v676 = vsel %vm665, %v636, 0
      %v677 = vsel %vm665, %v638, 0
      %v678 = vsel %vm665, %v640, 0
      %v679 = vsel %vm665, %v642, 0
      %v680 = vsel %vm665, %v644, 0
      %v681 = vsel %vm665, %v646, 0
      %v684 = vunpack.c.l.b16 %v391
      %v685 = vunpack.c.l.b16 %v392
      %v686 = vpack.c.b16 %v685, %v684
      %v688 = vshrl.u32 %v686, 16
      %v690 = vrot.slane %v688, 7
      %v691 = vshll.u32 %v686, 16
      %v693 = vor.u32 %v690, %v691
      %v695 = vsel %vm598, 0, %v693
      %v696 = vrot.slane %v691, 1
      %v697 = vor.u32 %v688, %v696
      %v699 = vsel %vm665, %v697, 0
      %v701 = vunpack.c.l.b16 0
      %v702 = vpack.c.b16 %v701, %v701
      %v704 = vshrl.u32 %v702, 16
      %v706 = vrot.slane %v704, 7
      %v707 = vshll.u32 %v702, 16
      %v709 = vor.u32 %v706, %v707
      %v711 = vsel %vm598, 0, %v709
      %v712 = vrot.slane %v707, 1
      %v713 = vor.u32 %v704, %v712
      %v715 = vsel %vm665, %v713, 0
      %716 = vrot.lane.b32.xlu0 0, 4
      %v717 = vpop.permute.xlu0 %716
      %718 = vrot.lane.b32.xlu0 %v453, 4
      %v719 = vpop.permute.xlu0 %718
      %720 = vrot.lane.b32.xlu0 %v454, 4
      %v721 = vpop.permute.xlu0 %720
      %722 = vrot.lane.b32.xlu0 %v455, 4
      %v723 = vpop.permute.xlu0 %722
      %724 = vrot.lane.b32.xlu0 %v456, 4
      %v725 = vpop.permute.xlu0 %724
      %726 = vrot.lane.b32.xlu0 %v457, 4
      %v727 = vpop.permute.xlu0 %726
      %728 = vrot.lane.b32.xlu0 %v458, 4
      %v729 = vpop.permute.xlu0 %728
      %730 = vrot.lane.b32.xlu0 %v459, 4
      %v731 = vpop.permute.xlu0 %730
      %732 = vrot.lane.b32.xlu0 %v460, 4
      %v733 = vpop.permute.xlu0 %732
      %734 = vrot.lane.b32.xlu0 %v461, 4
      %v735 = vpop.permute.xlu0 %734
      %736 = vrot.lane.b32.xlu0 %v462, 4
      %v737 = vpop.permute.xlu0 %736
      %738 = vrot.lane.b32.xlu0 %v463, 4
      %v739 = vpop.permute.xlu0 %738
      %740 = vrot.lane.b32.xlu0 %v464, 4
      %v741 = vpop.permute.xlu0 %740
      %742 = vrot.lane.b32.xlu0 %v465, 4
      %v743 = vpop.permute.xlu0 %742
      %744 = vrot.lane.b32.xlu0 %v466, 4
      %v745 = vpop.permute.xlu0 %744
      %746 = vrot.lane.b32.xlu0 %v467, 4
      %v747 = vpop.permute.xlu0 %746
      %764 = vrot.lane.b32.xlu0 %v666, 8
      %v765 = vpop.permute.xlu0 %764
      %766 = vrot.lane.b32.xlu0 %v667, 8
      %v767 = vpop.permute.xlu0 %766
      %768 = vrot.lane.b32.xlu0 %v668, 8
      %v769 = vpop.permute.xlu0 %768
      %770 = vrot.lane.b32.xlu0 %v669, 8
      %v771 = vpop.permute.xlu0 %770
      %772 = vrot.lane.b32.xlu0 %v670, 8
      %v773 = vpop.permute.xlu0 %772
      %774 = vrot.lane.b32.xlu0 %v671, 8
      %v775 = vpop.permute.xlu0 %774
      %776 = vrot.lane.b32.xlu0 %v672, 8
      %v777 = vpop.permute.xlu0 %776
      %778 = vrot.lane.b32.xlu0 %v673, 8
      %v779 = vpop.permute.xlu0 %778
      %780 = vrot.lane.b32.xlu0 %v674, 8
      %v781 = vpop.permute.xlu0 %780
      %782 = vrot.lane.b32.xlu0 %v675, 8
      %v783 = vpop.permute.xlu0 %782
      %784 = vrot.lane.b32.xlu0 %v676, 8
      %v785 = vpop.permute.xlu0 %784
      %786 = vrot.lane.b32.xlu0 %v677, 8
      %v787 = vpop.permute.xlu0 %786
      %788 = vrot.lane.b32.xlu0 %v678, 8
      %v789 = vpop.permute.xlu0 %788
      %790 = vrot.lane.b32.xlu0 %v679, 8
      %v791 = vpop.permute.xlu0 %790
      %792 = vrot.lane.b32.xlu0 %v680, 8
      %v793 = vpop.permute.xlu0 %792
      %794 = vrot.lane.b32.xlu0 %v681, 8
      %v795 = vpop.permute.xlu0 %794
      %812 = vrot.lane.b32.xlu0 %v600, 12
      %v813 = vpop.permute.xlu0 %812
      %814 = vrot.lane.b32.xlu0 %v601, 12
      %v815 = vpop.permute.xlu0 %814
      %816 = vrot.lane.b32.xlu0 %v602, 12
      %v817 = vpop.permute.xlu0 %816
      %818 = vrot.lane.b32.xlu0 %v603, 12
      %v819 = vpop.permute.xlu0 %818
      %820 = vrot.lane.b32.xlu0 %v604, 12
      %v821 = vpop.permute.xlu0 %820
      %822 = vrot.lane.b32.xlu0 %v605, 12
      %v823 = vpop.permute.xlu0 %822
      %824 = vrot.lane.b32.xlu0 %v606, 12
      %v825 = vpop.permute.xlu0 %824
      %826 = vrot.lane.b32.xlu0 %v607, 12
      %v827 = vpop.permute.xlu0 %826
      %828 = vrot.lane.b32.xlu0 %v608, 12
      %v829 = vpop.permute.xlu0 %828
      %830 = vrot.lane.b32.xlu0 %v609, 12
      %v831 = vpop.permute.xlu0 %830
      %832 = vrot.lane.b32.xlu0 %v610, 12
      %v833 = vpop.permute.xlu0 %832
      %834 = vrot.lane.b32.xlu0 %v611, 12
      %v835 = vpop.permute.xlu0 %834
      %836 = vrot.lane.b32.xlu0 %v612, 12
      %v837 = vpop.permute.xlu0 %836
      %838 = vrot.lane.b32.xlu0 %v613, 12
      %v839 = vpop.permute.xlu0 %838
      %840 = vrot.lane.b32.xlu0 %v614, 12
      %v841 = vpop.permute.xlu0 %840
      %842 = vrot.lane.b32.xlu0 %v695, 12
      %v843 = vpop.permute.xlu0 %842
      %844 = vrot.lane.b32.xlu0 %v453, 16
      %v845 = vpop.permute.xlu0 %844
      %846 = vrot.lane.b32.xlu0 %v454, 16
      %v847 = vpop.permute.xlu0 %846
      %848 = vrot.lane.b32.xlu0 %v455, 16
      %v849 = vpop.permute.xlu0 %848
      %850 = vrot.lane.b32.xlu0 %v456, 16
      %v851 = vpop.permute.xlu0 %850
      %852 = vrot.lane.b32.xlu0 %v457, 16
      %v853 = vpop.permute.xlu0 %852
      %854 = vrot.lane.b32.xlu0 %v458, 16
      %v855 = vpop.permute.xlu0 %854
      %856 = vrot.lane.b32.xlu0 %v459, 16
      %v857 = vpop.permute.xlu0 %856
      %858 = vrot.lane.b32.xlu0 %v460, 16
      %v859 = vpop.permute.xlu0 %858
      %860 = vrot.lane.b32.xlu0 %v461, 16
      %v861 = vpop.permute.xlu0 %860
      %862 = vrot.lane.b32.xlu0 %v462, 16
      %v863 = vpop.permute.xlu0 %862
      %864 = vrot.lane.b32.xlu0 %v463, 16
      %v865 = vpop.permute.xlu0 %864
      %866 = vrot.lane.b32.xlu0 %v464, 16
      %v867 = vpop.permute.xlu0 %866
      %868 = vrot.lane.b32.xlu0 %v465, 16
      %v869 = vpop.permute.xlu0 %868
      %870 = vrot.lane.b32.xlu0 %v466, 16
      %v871 = vpop.permute.xlu0 %870
      %872 = vrot.lane.b32.xlu0 %v467, 16
      %v873 = vpop.permute.xlu0 %872
      %874 = vrot.lane.b32.xlu0 %v686, 16
      %v875 = vpop.permute.xlu0 %874
      %877 = vrot.lane.b32.xlu0 %v667, 20
      %v878 = vpop.permute.xlu0 %877
      %879 = vrot.lane.b32.xlu0 %v668, 20
      %v880 = vpop.permute.xlu0 %879
      %881 = vrot.lane.b32.xlu0 %v669, 20
      %v882 = vpop.permute.xlu0 %881
      %883 = vrot.lane.b32.xlu0 %v670, 20
      %v884 = vpop.permute.xlu0 %883
      %885 = vrot.lane.b32.xlu0 %v671, 20
      %v886 = vpop.permute.xlu0 %885
      %887 = vrot.lane.b32.xlu0 %v672, 20
      %v888 = vpop.permute.xlu0 %887
      %889 = vrot.lane.b32.xlu0 %v673, 20
      %v890 = vpop.permute.xlu0 %889
      %891 = vrot.lane.b32.xlu0 %v674, 20
      %v892 = vpop.permute.xlu0 %891
      %893 = vrot.lane.b32.xlu0 %v675, 20
      %v894 = vpop.permute.xlu0 %893
      %895 = vrot.lane.b32.xlu0 %v676, 20
      %v896 = vpop.permute.xlu0 %895
      %897 = vrot.lane.b32.xlu0 %v677, 20
      %v898 = vpop.permute.xlu0 %897
      %899 = vrot.lane.b32.xlu0 %v678, 20
      %v900 = vpop.permute.xlu0 %899
      %901 = vrot.lane.b32.xlu0 %v679, 20
      %v902 = vpop.permute.xlu0 %901
      %903 = vrot.lane.b32.xlu0 %v680, 20
      %v904 = vpop.permute.xlu0 %903
      %905 = vrot.lane.b32.xlu0 %v681, 20
      %v906 = vpop.permute.xlu0 %905
      %907 = vrot.lane.b32.xlu0 %v699, 20
      %v908 = vpop.permute.xlu0 %907
      %910 = vrot.lane.b32.xlu0 %v601, 24
      %v911 = vpop.permute.xlu0 %910
      %912 = vrot.lane.b32.xlu0 %v602, 24
      %v913 = vpop.permute.xlu0 %912
      %914 = vrot.lane.b32.xlu0 %v603, 24
      %v915 = vpop.permute.xlu0 %914
      %916 = vrot.lane.b32.xlu0 %v604, 24
      %v917 = vpop.permute.xlu0 %916
      %918 = vrot.lane.b32.xlu0 %v605, 24
      %v919 = vpop.permute.xlu0 %918
      %920 = vrot.lane.b32.xlu0 %v606, 24
      %v921 = vpop.permute.xlu0 %920
      %922 = vrot.lane.b32.xlu0 %v607, 24
      %v923 = vpop.permute.xlu0 %922
      %924 = vrot.lane.b32.xlu0 %v608, 24
      %v925 = vpop.permute.xlu0 %924
      %926 = vrot.lane.b32.xlu0 %v609, 24
      %v927 = vpop.permute.xlu0 %926
      %928 = vrot.lane.b32.xlu0 %v610, 24
      %v929 = vpop.permute.xlu0 %928
      %930 = vrot.lane.b32.xlu0 %v611, 24
      %v931 = vpop.permute.xlu0 %930
      %932 = vrot.lane.b32.xlu0 %v612, 24
      %v933 = vpop.permute.xlu0 %932
      %934 = vrot.lane.b32.xlu0 %v613, 24
      %v935 = vpop.permute.xlu0 %934
      %936 = vrot.lane.b32.xlu0 %v614, 24
      %v937 = vpop.permute.xlu0 %936
      %938 = vrot.lane.b32.xlu0 %v695, 24
      %v939 = vpop.permute.xlu0 %938
      %940 = vrot.lane.b32.xlu0 %v711, 24
      %v941 = vpop.permute.xlu0 %940
      %942 = vrot.lane.b32.xlu0 %v454, 28
      %v943 = vpop.permute.xlu0 %942
      %944 = vrot.lane.b32.xlu0 %v455, 28
      %v945 = vpop.permute.xlu0 %944
      %946 = vrot.lane.b32.xlu0 %v456, 28
      %v947 = vpop.permute.xlu0 %946
      %948 = vrot.lane.b32.xlu0 %v457, 28
      %v949 = vpop.permute.xlu0 %948
      %950 = vrot.lane.b32.xlu0 %v458, 28
      %v951 = vpop.permute.xlu0 %950
      %952 = vrot.lane.b32.xlu0 %v459, 28
      %v953 = vpop.permute.xlu0 %952
      %954 = vrot.lane.b32.xlu0 %v460, 28
      %v955 = vpop.permute.xlu0 %954
      %956 = vrot.lane.b32.xlu0 %v461, 28
      %v957 = vpop.permute.xlu0 %956
      %958 = vrot.lane.b32.xlu0 %v462, 28
      %v959 = vpop.permute.xlu0 %958
      %960 = vrot.lane.b32.xlu0 %v463, 28
      %v961 = vpop.permute.xlu0 %960
      %962 = vrot.lane.b32.xlu0 %v464, 28
      %v963 = vpop.permute.xlu0 %962
      %964 = vrot.lane.b32.xlu0 %v465, 28
      %v965 = vpop.permute.xlu0 %964
      %966 = vrot.lane.b32.xlu0 %v466, 28
      %v967 = vpop.permute.xlu0 %966
      %968 = vrot.lane.b32.xlu0 %v467, 28
      %v969 = vpop.permute.xlu0 %968
      %970 = vrot.lane.b32.xlu0 %v686, 28
      %v971 = vpop.permute.xlu0 %970
      %972 = vrot.lane.b32.xlu0 %v702, 28
      %v973 = vpop.permute.xlu0 %972
      %975 = vrot.lane.b32.xlu0 %v668, 32
      %v976 = vpop.permute.xlu0 %975
      %977 = vrot.lane.b32.xlu0 %v669, 32
      %v978 = vpop.permute.xlu0 %977
      %979 = vrot.lane.b32.xlu0 %v670, 32
      %v980 = vpop.permute.xlu0 %979
      %981 = vrot.lane.b32.xlu0 %v671, 32
      %v982 = vpop.permute.xlu0 %981
      %983 = vrot.lane.b32.xlu0 %v672, 32
      %v984 = vpop.permute.xlu0 %983
      %985 = vrot.lane.b32.xlu0 %v673, 32
      %v986 = vpop.permute.xlu0 %985
      %987 = vrot.lane.b32.xlu0 %v674, 32
      %v988 = vpop.permute.xlu0 %987
      %989 = vrot.lane.b32.xlu0 %v675, 32
      %v990 = vpop.permute.xlu0 %989
      %991 = vrot.lane.b32.xlu0 %v676, 32
      %v992 = vpop.permute.xlu0 %991
      %993 = vrot.lane.b32.xlu0 %v677, 32
      %v994 = vpop.permute.xlu0 %993
      %995 = vrot.lane.b32.xlu0 %v678, 32
      %v996 = vpop.permute.xlu0 %995
      %997 = vrot.lane.b32.xlu0 %v679, 32
      %v998 = vpop.permute.xlu0 %997
      %999 = vrot.lane.b32.xlu0 %v680, 32
      %v1000 = vpop.permute.xlu0 %999
      %1001 = vrot.lane.b32.xlu0 %v681, 32
      %v1002 = vpop.permute.xlu0 %1001
      %1003 = vrot.lane.b32.xlu0 %v699, 32
      %v1004 = vpop.permute.xlu0 %1003
      %1005 = vrot.lane.b32.xlu0 %v715, 32
      %v1006 = vpop.permute.xlu0 %1005
      %vm1007 = vcmask 31744
      %v1010 = vsel %vm1007, %v599, %v717
      %v1013 = vsel %vm1007, %v600, %v719
      %v1016 = vsel %vm1007, %v601, %v721
      %v1019 = vsel %vm1007, %v602, %v723
      %v1022 = vsel %vm1007, %v603, %v725
      %v1025 = vsel %vm1007, %v604, %v727
      %v1028 = vsel %vm1007, %v605, %v729
      %v1031 = vsel %vm1007, %v606, %v731
      %v1034 = vsel %vm1007, %v607, %v733
      %v1037 = vsel %vm1007, %v608, %v735
      %v1040 = vsel %vm1007, %v609, %v737
      %v1043 = vsel %vm1007, %v610, %v739
      %v1046 = vsel %vm1007, %v611, %v741
      %v1049 = vsel %vm1007, %v612, %v743
      %v1052 = vsel %vm1007, %v613, %v745
      %v1055 = vsel %vm1007, %v614, %v747
      %vm1056 = vcmask 64512
      %v1058 = vsel %vm1056, %v1010, %v765
      %v1060 = vsel %vm1056, %v1013, %v767
      %v1062 = vsel %vm1056, %v1016, %v769
      %v1064 = vsel %vm1056, %v1019, %v771
      %v1066 = vsel %vm1056, %v1022, %v773
      %v1068 = vsel %vm1056, %v1025, %v775
      %v1070 = vsel %vm1056, %v1028, %v777
      %v1072 = vsel %vm1056, %v1031, %v779
      %v1074 = vsel %vm1056, %v1034, %v781
      %v1076 = vsel %vm1056, %v1037, %v783
      %v1078 = vsel %vm1056, %v1040, %v785
      %v1080 = vsel %vm1056, %v1043, %v787
      %v1082 = vsel %vm1056, %v1046, %v789
      %v1084 = vsel %vm1056, %v1049, %v791
      %v1086 = vsel %vm1056, %v1052, %v793
      %v1088 = vsel %vm1056, %v1055, %v795
      %vm1089 = vcmask 97280
      %v1091 = vsel %vm1089, %v1058, %v813
      %v1093 = vsel %vm1089, %v1060, %v815
      %v1095 = vsel %vm1089, %v1062, %v817
      %v1097 = vsel %vm1089, %v1064, %v819
      %v1099 = vsel %vm1089, %v1066, %v821
      %v1101 = vsel %vm1089, %v1068, %v823
      %v1103 = vsel %vm1089, %v1070, %v825
      %v1105 = vsel %vm1089, %v1072, %v827
      %v1107 = vsel %vm1089, %v1074, %v829
      %v1109 = vsel %vm1089, %v1076, %v831
      %v1111 = vsel %vm1089, %v1078, %v833
      %v1113 = vsel %vm1089, %v1080, %v835
      %v1115 = vsel %vm1089, %v1082, %v837
      %v1117 = vsel %vm1089, %v1084, %v839
      %v1119 = vsel %vm1089, %v1086, %v841
      %v1121 = vsel %vm1089, %v1088, %v843
      %vm1122 = vcmask 130048
      %v1124 = vsel %vm1122, %v1091, %v845
      %v1126 = vsel %vm1122, %v1093, %v847
      %v1128 = vsel %vm1122, %v1095, %v849
      %v1130 = vsel %vm1122, %v1097, %v851
      %v1132 = vsel %vm1122, %v1099, %v853
      %v1134 = vsel %vm1122, %v1101, %v855
      %v1136 = vsel %vm1122, %v1103, %v857
      %v1138 = vsel %vm1122, %v1105, %v859
      %v1140 = vsel %vm1122, %v1107, %v861
      %v1142 = vsel %vm1122, %v1109, %v863
      %v1144 = vsel %vm1122, %v1111, %v865
      %v1146 = vsel %vm1122, %v1113, %v867
      %v1148 = vsel %vm1122, %v1115, %v869
      %v1150 = vsel %vm1122, %v1117, %v871
      %v1152 = vsel %vm1122, %v1119, %v873
      %v1154 = vsel %vm1122, %v1121, %v875
      %vm1155 = vcmask 162816
      %v1157 = vsel %vm1155, %v1124, %v878
      %v1159 = vsel %vm1155, %v1126, %v880
      %v1161 = vsel %vm1155, %v1128, %v882
      %v1163 = vsel %vm1155, %v1130, %v884
      %v1165 = vsel %vm1155, %v1132, %v886
      %v1167 = vsel %vm1155, %v1134, %v888
      %v1169 = vsel %vm1155, %v1136, %v890
      %v1171 = vsel %vm1155, %v1138, %v892
      %v1173 = vsel %vm1155, %v1140, %v894
      %v1175 = vsel %vm1155, %v1142, %v896
      %v1177 = vsel %vm1155, %v1144, %v898
      %v1179 = vsel %vm1155, %v1146, %v900
      %v1181 = vsel %vm1155, %v1148, %v902
      %v1183 = vsel %vm1155, %v1150, %v904
      %v1185 = vsel %vm1155, %v1152, %v906
      %v1187 = vsel %vm1155, %v1154, %v908
      %vm1188 = vcmask 195584
      %v1190 = vsel %vm1188, %v1157, %v911
      %v1192 = vsel %vm1188, %v1159, %v913
      %v1194 = vsel %vm1188, %v1161, %v915
      %v1196 = vsel %vm1188, %v1163, %v917
      %v1198 = vsel %vm1188, %v1165, %v919
      %v1200 = vsel %vm1188, %v1167, %v921
      %v1202 = vsel %vm1188, %v1169, %v923
      %v1204 = vsel %vm1188, %v1171, %v925
      %v1206 = vsel %vm1188, %v1173, %v927
      %v1208 = vsel %vm1188, %v1175, %v929
      %v1210 = vsel %vm1188, %v1177, %v931
      %v1212 = vsel %vm1188, %v1179, %v933
      %v1214 = vsel %vm1188, %v1181, %v935
      %v1216 = vsel %vm1188, %v1183, %v937
      %v1218 = vsel %vm1188, %v1185, %v939
      %v1220 = vsel %vm1188, %v1187, %v941
      %vm1221 = vcmask 228352
      %v1223 = vsel %vm1221, %v1190, %v943
      %v1225 = vsel %vm1221, %v1192, %v945
      %v1227 = vsel %vm1221, %v1194, %v947
      %v1229 = vsel %vm1221, %v1196, %v949
      %v1231 = vsel %vm1221, %v1198, %v951
      %v1233 = vsel %vm1221, %v1200, %v953
      %v1235 = vsel %vm1221, %v1202, %v955
      %v1237 = vsel %vm1221, %v1204, %v957
      %v1239 = vsel %vm1221, %v1206, %v959
      %v1241 = vsel %vm1221, %v1208, %v961
      %v1243 = vsel %vm1221, %v1210, %v963
      %v1245 = vsel %vm1221, %v1212, %v965
      %v1247 = vsel %vm1221, %v1214, %v967
      %v1249 = vsel %vm1221, %v1216, %v969
      %v1251 = vsel %vm1221, %v1218, %v971
      %v1253 = vsel %vm1221, %v1220, %v973
      %vm1254 = vcmask 261120
      %v1256 = vsel %vm1254, %v1223, %v976
      %v1258 = vsel %vm1254, %v1225, %v978
      %v1260 = vsel %vm1254, %v1227, %v980
      %v1262 = vsel %vm1254, %v1229, %v982
      %v1264 = vsel %vm1254, %v1231, %v984
      %v1266 = vsel %vm1254, %v1233, %v986
      %v1268 = vsel %vm1254, %v1235, %v988
      %v1270 = vsel %vm1254, %v1237, %v990
      %v1272 = vsel %vm1254, %v1239, %v992
      %v1274 = vsel %vm1254, %v1241, %v994
      %v1276 = vsel %vm1254, %v1243, %v996
      %v1278 = vsel %vm1254, %v1245, %v998
      %v1280 = vsel %vm1254, %v1247, %v1000
      %v1282 = vsel %vm1254, %v1249, %v1002
      %v1284 = vsel %vm1254, %v1251, %v1004
      %v1286 = vsel %vm1254, %v1253, %v1006
      %v1287 = vld [vmem:[%s1] sm:$0xf]
      %v1288 = vld [vmem:[%s1 + $0x4] sm:$0xf]
      %v1289 = vld [vmem:[%s1 + $0x8] sm:$0xf]
      %v1290 = vld [vmem:[%s1 + $0xc] sm:$0xf]
      %v1291 = vld [vmem:[%s1 + $0x10] sm:$0x3]
      %v1297 = vunpack.c.l.b16 %v1287
      %v1298 = vunpack.c.l.b16 %v1288
      %v1299 = vunpack.c.l.b16 %v1289
      %v1300 = vunpack.c.l.b16 %v1290
      %v1301 = vunpack.c.l.b16 %v1291
      %v1302 = vpack.c.b16 %v1298, %v1297
      %v1303 = vpack.c.b16 %v1300, %v1299
      %v1304 = vpack.c.b16 %v1301, %v1301
      %vm1307 = vcmask 293888
      %v1308 = vsel %vm1307, %v1256, 0
      %v1310 = vsel %vm1307, %v1258, 0
      %v1312 = vsel %vm1307, %v1260, 0
      %v1314 = vsel %vm1307, %v1262, 0
      %v1316 = vsel %vm1307, %v1264, 0
      %v1318 = vsel %vm1307, %v1266, 0
      %v1320 = vsel %vm1307, %v1268, 0
      %v1322 = vsel %vm1307, %v1270, 0
      %v1324 = vsel %vm1307, %v1272, 0
      %v1326 = vsel %vm1307, %v1274, 0
      %v1328 = vsel %vm1307, %v1276, 0
      %v1330 = vsel %vm1307, %v1278, 0
      %v1332 = vsel %vm1307, %v1280, 0
      %v1334 = vsel %vm1307, %v1282, 0
      %v1336 = vsel %vm1307, %v1284, 0
      %v1338 = vsel %vm1307, %v1286, 0
      %vm1340 = vcmask 1041408
      %v1342 = vsel %vm1340, %v1304, 0
      %1344 = vmatpush.bf16.msra.mxu0 0
      %1345 = vmatpush.bf16.msra.mxu0 0
      %1346 = vmatpush.bf16.msra.mxu0 0
      %1347 = vmatpush.bf16.msra.mxu0 0
      %1348 = vmatpush.bf16.msra.mxu0 0
      %1349 = vmatpush.bf16.msra.mxu0 %v1342
      %1350 = vmatpush.bf16.msra.mxu0 %v1303
      %1351 = vmatpush.bf16.msra.mxu0 %v1302
      %1352 = vmatmul.bf16.gmra.mxu0 %v1308
      %v1353 = vpop.f32.mrf.mxu0
      %v1354 = vadd.f32 0.0, %v1353
      %v1355 = vpop.f32.mrf.mxu0
      %v1356 = vadd.f32 0.0, %v1355
      %1357 = vmatmul.bf16.gmra.mxu0 %v1310
      %v1358 = vpop.f32.mrf.mxu0
      %v1359 = vadd.f32 0.0, %v1358
      %v1360 = vpop.f32.mrf.mxu0
      %v1361 = vadd.f32 0.0, %v1360
      %1362 = vmatmul.bf16.gmra.mxu0 %v1312
      %v1363 = vpop.f32.mrf.mxu0
      %v1364 = vadd.f32 0.0, %v1363
      %v1365 = vpop.f32.mrf.mxu0
      %v1366 = vadd.f32 0.0, %v1365
      %1367 = vmatmul.bf16.gmra.mxu0 %v1314
      %v1368 = vpop.f32.mrf.mxu0
      %v1369 = vadd.f32 0.0, %v1368
      %v1370 = vpop.f32.mrf.mxu0
      %v1371 = vadd.f32 0.0, %v1370
      %1372 = vmatmul.bf16.gmra.mxu0 %v1316
      %v1373 = vpop.f32.mrf.mxu0
      %v1374 = vadd.f32 0.0, %v1373
      %v1375 = vpop.f32.mrf.mxu0
      %v1376 = vadd.f32 0.0, %v1375
      %1377 = vmatmul.bf16.gmra.mxu0 %v1318
      %v1378 = vpop.f32.mrf.mxu0
      %v1379 = vadd.f32 0.0, %v1378
      %v1380 = vpop.f32.mrf.mxu0
      %v1381 = vadd.f32 0.0, %v1380
      %1382 = vmatmul.bf16.gmra.mxu0 %v1320
      %v1383 = vpop.f32.mrf.mxu0
      %v1384 = vadd.f32 0.0, %v1383
      %v1385 = vpop.f32.mrf.mxu0
      %v1386 = vadd.f32 0.0, %v1385
      %1387 = vmatmul.bf16.gmra.mxu0 %v1322
      %v1388 = vpop.f32.mrf.mxu0
      %v1389 = vadd.f32 0.0, %v1388
      %v1390 = vpop.f32.mrf.mxu0
      %v1391 = vadd.f32 0.0, %v1390
      %1392 = vmatmul.bf16.gmra.mxu0 %v1324
      %v1393 = vpop.f32.mrf.mxu0
      %v1394 = vadd.f32 0.0, %v1393
      %v1395 = vpop.f32.mrf.mxu0
      %v1396 = vadd.f32 0.0, %v1395
      %1397 = vmatmul.bf16.gmra.mxu0 %v1326
      %v1398 = vpop.f32.mrf.mxu0
      %v1399 = vadd.f32 0.0, %v1398
      %v1400 = vpop.f32.mrf.mxu0
      %v1401 = vadd.f32 0.0, %v1400
      %1402 = vmatmul.bf16.gmra.mxu0 %v1328
      %v1403 = vpop.f32.mrf.mxu0
      %v1404 = vadd.f32 0.0, %v1403
      %v1405 = vpop.f32.mrf.mxu0
      %v1406 = vadd.f32 0.0, %v1405
      %1407 = vmatmul.bf16.gmra.mxu0 %v1330
      %v1408 = vpop.f32.mrf.mxu0
      %v1409 = vadd.f32 0.0, %v1408
      %v1410 = vpop.f32.mrf.mxu0
      %v1411 = vadd.f32 0.0, %v1410
      %1412 = vmatmul.bf16.gmra.mxu0 %v1332
      %v1413 = vpop.f32.mrf.mxu0
      %v1414 = vadd.f32 0.0, %v1413
      %v1415 = vpop.f32.mrf.mxu0
      %v1416 = vadd.f32 0.0, %v1415
      %1417 = vmatmul.bf16.gmra.mxu0 %v1334
      %v1418 = vpop.f32.mrf.mxu0
      %v1419 = vadd.f32 0.0, %v1418
      %v1420 = vpop.f32.mrf.mxu0
      %v1421 = vadd.f32 0.0, %v1420
      %1422 = vmatmul.bf16.gmra.mxu0 %v1336
      %v1423 = vpop.f32.mrf.mxu0
      %v1424 = vadd.f32 0.0, %v1423
      %v1425 = vpop.f32.mrf.mxu0
      %v1426 = vadd.f32 0.0, %v1425
      %1427 = vmatmul.bf16.gmra.mxu0 %v1338
      %v1428 = vpop.f32.mrf.mxu0
      %v1429 = vadd.f32 0.0, %v1428
      %v1430 = vpop.f32.mrf.mxu0
      %v1431 = vadd.f32 0.0, %v1430
      %1432 = vdwg.mxu0
      %v1433 = vld [vmem:[%s2] sm:$0x1]
      %v1435 = vperm.slane %v1433, 0
      %v1437 = vmul.f32 %v1354, %v1435
      %v1438 = vmul.f32 %v1356, %v1435
      %v1439 = vmul.f32 %v1359, %v1435
      %v1440 = vmul.f32 %v1361, %v1435
      %v1441 = vmul.f32 %v1364, %v1435
      %v1442 = vmul.f32 %v1366, %v1435
      %v1443 = vmul.f32 %v1369, %v1435
      %v1444 = vmul.f32 %v1371, %v1435
      %v1445 = vmul.f32 %v1374, %v1435
      %v1446 = vmul.f32 %v1376, %v1435
      %v1447 = vmul.f32 %v1379, %v1435
      %v1448 = vmul.f32 %v1381, %v1435
      %v1449 = vmul.f32 %v1384, %v1435
      %v1450 = vmul.f32 %v1386, %v1435
      %v1451 = vmul.f32 %v1389, %v1435
      %v1452 = vmul.f32 %v1391, %v1435
      %v1453 = vmul.f32 %v1394, %v1435
      %v1454 = vmul.f32 %v1396, %v1435
      %v1455 = vmul.f32 %v1399, %v1435
      %v1456 = vmul.f32 %v1401, %v1435
      %v1457 = vmul.f32 %v1404, %v1435
      %v1458 = vmul.f32 %v1406, %v1435
      %v1459 = vmul.f32 %v1409, %v1435
      %v1460 = vmul.f32 %v1411, %v1435
      %v1461 = vmul.f32 %v1414, %v1435
      %v1462 = vmul.f32 %v1416, %v1435
      %v1463 = vmul.f32 %v1419, %v1435
      %v1464 = vmul.f32 %v1421, %v1435
      %v1465 = vmul.f32 %v1424, %v1435
      %v1466 = vmul.f32 %v1426, %v1435
      %v1467 = vmul.f32 %v1429, %v1435
      %v1468 = vmul.f32 %v1431, %v1435
      %v1469 = vld [vmem:[%s3] sm:$0x1]
      %v1471 = vperm.slane %v1469, 0
      %v1473 = vadd.f32 %v1437, %v1471
      %v1474 = vadd.f32 %v1438, %v1471
      %v1475 = vadd.f32 %v1439, %v1471
      %v1476 = vadd.f32 %v1440, %v1471
      %v1477 = vadd.f32 %v1441, %v1471
      %v1478 = vadd.f32 %v1442, %v1471
      %v1479 = vadd.f32 %v1443, %v1471
      %v1480 = vadd.f32 %v1444, %v1471
      %v1481 = vadd.f32 %v1445, %v1471
      %v1482 = vadd.f32 %v1446, %v1471
      %v1483 = vadd.f32 %v1447, %v1471
      %v1484 = vadd.f32 %v1448, %v1471
      %v1485 = vadd.f32 %v1449, %v1471
      %v1486 = vadd.f32 %v1450, %v1471
      %v1487 = vadd.f32 %v1451, %v1471
      %v1488 = vadd.f32 %v1452, %v1471
      %v1489 = vadd.f32 %v1453, %v1471
      %v1490 = vadd.f32 %v1454, %v1471
      %v1491 = vadd.f32 %v1455, %v1471
      %v1492 = vadd.f32 %v1456, %v1471
      %v1493 = vadd.f32 %v1457, %v1471
      %v1494 = vadd.f32 %v1458, %v1471
      %v1495 = vadd.f32 %v1459, %v1471
      %v1496 = vadd.f32 %v1460, %v1471
      %v1497 = vadd.f32 %v1461, %v1471
      %v1498 = vadd.f32 %v1462, %v1471
      %v1499 = vadd.f32 %v1463, %v1471
      %v1500 = vadd.f32 %v1464, %v1471
      %v1501 = vadd.f32 %v1465, %v1471
      %v1502 = vadd.f32 %v1466, %v1471
      %v1503 = vadd.f32 %v1467, %v1471
      %v1504 = vadd.f32 %v1468, %v1471
      %v1505 = vmax.f32 %v1473, 0.0
      %v1506 = vmax.f32 %v1474, 0.0
      %v1507 = vmax.f32 %v1475, 0.0
      %v1508 = vmax.f32 %v1476, 0.0
      %v1509 = vmax.f32 %v1477, 0.0
      %v1510 = vmax.f32 %v1478, 0.0
      %v1511 = vmax.f32 %v1479, 0.0
      %v1512 = vmax.f32 %v1480, 0.0
      %v1513 = vmax.f32 %v1481, 0.0
      %v1514 = vmax.f32 %v1482, 0.0
      %v1515 = vmax.f32 %v1483, 0.0
      %v1516 = vmax.f32 %v1484, 0.0
      %v1517 = vmax.f32 %v1485, 0.0
      %v1518 = vmax.f32 %v1486, 0.0
      %v1519 = vmax.f32 %v1487, 0.0
      %v1520 = vmax.f32 %v1488, 0.0
      %v1521 = vmax.f32 %v1489, 0.0
      %v1522 = vmax.f32 %v1490, 0.0
      %v1523 = vmax.f32 %v1491, 0.0
      %v1524 = vmax.f32 %v1492, 0.0
      %v1525 = vmax.f32 %v1493, 0.0
      %v1526 = vmax.f32 %v1494, 0.0
      %v1527 = vmax.f32 %v1495, 0.0
      %v1528 = vmax.f32 %v1496, 0.0
      %v1529 = vmax.f32 %v1497, 0.0
      %v1530 = vmax.f32 %v1498, 0.0
      %v1531 = vmax.f32 %v1499, 0.0
      %v1532 = vmax.f32 %v1500, 0.0
      %v1533 = vmax.f32 %v1501, 0.0
      %v1534 = vmax.f32 %v1502, 0.0
      %v1535 = vmax.f32 %v1503, 0.0
      %v1536 = vmax.f32 %v1504, 0.0
      %v1537 = vpack.c.bf16 %v1505, %v1505
      %v1538 = vpack.c.bf16 %v1506, %v1506
      %v1539 = vpack.c.bf16 %v1507, %v1507
      %v1540 = vpack.c.bf16 %v1508, %v1508
      %v1541 = vpack.c.bf16 %v1509, %v1509
      %v1542 = vpack.c.bf16 %v1510, %v1510
      %v1543 = vpack.c.bf16 %v1511, %v1511
      %v1544 = vpack.c.bf16 %v1512, %v1512
      %v1545 = vpack.c.bf16 %v1513, %v1513
      %v1546 = vpack.c.bf16 %v1514, %v1514
      %v1547 = vpack.c.bf16 %v1515, %v1515
      %v1548 = vpack.c.bf16 %v1516, %v1516
      %v1549 = vpack.c.bf16 %v1517, %v1517
      %v1550 = vpack.c.bf16 %v1518, %v1518
      %v1551 = vpack.c.bf16 %v1519, %v1519
      %v1552 = vpack.c.bf16 %v1520, %v1520
      %v1553 = vpack.c.bf16 %v1521, %v1521
      %v1554 = vpack.c.bf16 %v1522, %v1522
      %v1555 = vpack.c.bf16 %v1523, %v1523
      %v1556 = vpack.c.bf16 %v1524, %v1524
      %v1557 = vpack.c.bf16 %v1525, %v1525
      %v1558 = vpack.c.bf16 %v1526, %v1526
      %v1559 = vpack.c.bf16 %v1527, %v1527
      %v1560 = vpack.c.bf16 %v1528, %v1528
      %v1561 = vpack.c.bf16 %v1529, %v1529
      %v1562 = vpack.c.bf16 %v1530, %v1530
      %v1563 = vpack.c.bf16 %v1531, %v1531
      %v1564 = vpack.c.bf16 %v1532, %v1532
      %v1565 = vpack.c.bf16 %v1533, %v1533
      %v1566 = vpack.c.bf16 %v1534, %v1534
      %v1567 = vpack.c.bf16 %v1535, %v1535
      %v1568 = vpack.c.bf16 %v1536, %v1536
      %v1599 = vunpack.c.l.b16 %v1537
      %v1600 = vunpack.c.l.b16 %v1538
      %v1601 = vunpack.c.l.b16 %v1539
      %v1602 = vunpack.c.l.b16 %v1540
      %v1603 = vunpack.c.l.b16 %v1541
      %v1604 = vunpack.c.l.b16 %v1542
      %v1605 = vunpack.c.l.b16 %v1543
      %v1606 = vunpack.c.l.b16 %v1544
      %v1607 = vunpack.c.l.b16 %v1545
      %v1608 = vunpack.c.l.b16 %v1546
      %v1609 = vunpack.c.l.b16 %v1547
      %v1610 = vunpack.c.l.b16 %v1548
      %v1611 = vunpack.c.l.b16 %v1549
      %v1612 = vunpack.c.l.b16 %v1550
      %v1613 = vunpack.c.l.b16 %v1551
      %v1614 = vunpack.c.l.b16 %v1552
      %v1615 = vunpack.c.l.b16 %v1553
      %v1616 = vunpack.c.l.b16 %v1554
      %v1617 = vunpack.c.l.b16 %v1555
      %v1618 = vunpack.c.l.b16 %v1556
      %v1619 = vunpack.c.l.b16 %v1557
      %v1620 = vunpack.c.l.b16 %v1558
      %v1621 = vunpack.c.l.b16 %v1559
      %v1622 = vunpack.c.l.b16 %v1560
      %v1623 = vunpack.c.l.b16 %v1561
      %v1624 = vunpack.c.l.b16 %v1562
      %v1625 = vunpack.c.l.b16 %v1563
      %v1626 = vunpack.c.l.b16 %v1564
      %v1627 = vunpack.c.l.b16 %v1565
      %v1628 = vunpack.c.l.b16 %v1566
      %v1629 = vpack.c.b16 %v1600, %v1599
      %v1630 = vpack.c.b16 %v1602, %v1601
      %v1631 = vpack.c.b16 %v1604, %v1603
      %v1632 = vpack.c.b16 %v1606, %v1605
      %v1633 = vpack.c.b16 %v1608, %v1607
      %v1634 = vpack.c.b16 %v1610, %v1609
      %v1635 = vpack.c.b16 %v1612, %v1611
      %v1636 = vpack.c.b16 %v1614, %v1613
      %v1637 = vpack.c.b16 %v1616, %v1615
      %v1638 = vpack.c.b16 %v1618, %v1617
      %v1639 = vpack.c.b16 %v1620, %v1619
      %v1640 = vpack.c.b16 %v1622, %v1621
      %v1641 = vpack.c.b16 %v1624, %v1623
      %v1642 = vpack.c.b16 %v1626, %v1625
      %v1643 = vpack.c.b16 %v1628, %v1627
      %v1645 = vshrl.u32 %v1629, 16
      %v1647 = vrot.slane %v1645, 7
      %v1648 = vshll.u32 %v1629, 16
      %v1650 = vor.u32 %v1647, %v1648
      %v1652 = vshrl.u32 %v1630, 16
      %v1654 = vrot.slane %v1652, 7
      %v1655 = vshll.u32 %v1630, 16
      %v1657 = vor.u32 %v1654, %v1655
      %v1659 = vshrl.u32 %v1631, 16
      %v1661 = vrot.slane %v1659, 7
      %v1662 = vshll.u32 %v1631, 16
      %v1664 = vor.u32 %v1661, %v1662
      %v1666 = vshrl.u32 %v1632, 16
      %v1668 = vrot.slane %v1666, 7
      %v1669 = vshll.u32 %v1632, 16
      %v1671 = vor.u32 %v1668, %v1669
      %v1673 = vshrl.u32 %v1633, 16
      %v1675 = vrot.slane %v1673, 7
      %v1676 = vshll.u32 %v1633, 16
      %v1678 = vor.u32 %v1675, %v1676
      %v1680 = vshrl.u32 %v1634, 16
      %v1682 = vrot.slane %v1680, 7
      %v1683 = vshll.u32 %v1634, 16
      %v1685 = vor.u32 %v1682, %v1683
      %v1687 = vshrl.u32 %v1635, 16
      %v1689 = vrot.slane %v1687, 7
      %v1690 = vshll.u32 %v1635, 16
      %v1692 = vor.u32 %v1689, %v1690
      %v1694 = vshrl.u32 %v1636, 16
      %v1696 = vrot.slane %v1694, 7
      %v1697 = vshll.u32 %v1636, 16
      %v1699 = vor.u32 %v1696, %v1697
      %v1701 = vshrl.u32 %v1637, 16
      %v1703 = vrot.slane %v1701, 7
      %v1704 = vshll.u32 %v1637, 16
      %v1706 = vor.u32 %v1703, %v1704
      %v1708 = vshrl.u32 %v1638, 16
      %v1710 = vrot.slane %v1708, 7
      %v1711 = vshll.u32 %v1638, 16
      %v1713 = vor.u32 %v1710, %v1711
      %v1715 = vshrl.u32 %v1639, 16
      %v1717 = vrot.slane %v1715, 7
      %v1718 = vshll.u32 %v1639, 16
      %v1720 = vor.u32 %v1717, %v1718
      %v1722 = vshrl.u32 %v1640, 16
      %v1724 = vrot.slane %v1722, 7
      %v1725 = vshll.u32 %v1640, 16
      %v1727 = vor.u32 %v1724, %v1725
      %v1729 = vshrl.u32 %v1641, 16
      %v1731 = vrot.slane %v1729, 7
      %v1732 = vshll.u32 %v1641, 16
      %v1734 = vor.u32 %v1731, %v1732
      %v1736 = vshrl.u32 %v1642, 16
      %v1738 = vrot.slane %v1736, 7
      %v1739 = vshll.u32 %v1642, 16
      %v1741 = vor.u32 %v1738, %v1739
      %v1743 = vshrl.u32 %v1643, 16
      %v1745 = vrot.slane %v1743, 7
      %v1746 = vshll.u32 %v1643, 16
      %v1748 = vor.u32 %v1745, %v1746
      %v1764 = vsel %vm598, 0, %v1650
      %v1765 = vsel %vm598, 0, %v1657
      %v1766 = vsel %vm598, 0, %v1664
      %v1767 = vsel %vm598, 0, %v1671
      %v1768 = vsel %vm598, 0, %v1678
      %v1769 = vsel %vm598, 0, %v1685
      %v1770 = vsel %vm598, 0, %v1692
      %v1771 = vsel %vm598, 0, %v1699
      %v1772 = vsel %vm598, 0, %v1706
      %v1773 = vsel %vm598, 0, %v1713
      %v1774 = vsel %vm598, 0, %v1720
      %v1775 = vsel %vm598, 0, %v1727
      %v1776 = vsel %vm598, 0, %v1734
      %v1777 = vsel %vm598, 0, %v1741
      %v1778 = vsel %vm598, 0, %v1748
      %v1779 = vrot.slane %v1648, 1
      %v1780 = vor.u32 %v1645, %v1779
      %v1781 = vrot.slane %v1655, 1
      %v1782 = vor.u32 %v1652, %v1781
      %v1783 = vrot.slane %v1662, 1
      %v1784 = vor.u32 %v1659, %v1783
      %v1785 = vrot.slane %v1669, 1
      %v1786 = vor.u32 %v1666, %v1785
      %v1787 = vrot.slane %v1676, 1
      %v1788 = vor.u32 %v1673, %v1787
      %v1789 = vrot.slane %v1683, 1
      %v1790 = vor.u32 %v1680, %v1789
      %v1791 = vrot.slane %v1690, 1
      %v1792 = vor.u32 %v1687, %v1791
      %v1793 = vrot.slane %v1697, 1
      %v1794 = vor.u32 %v1694, %v1793
      %v1795 = vrot.slane %v1704, 1
      %v1796 = vor.u32 %v1701, %v1795
      %v1797 = vrot.slane %v1711, 1
      %v1798 = vor.u32 %v1708, %v1797
      %v1799 = vrot.slane %v1718, 1
      %v1800 = vor.u32 %v1715, %v1799
      %v1801 = vrot.slane %v1725, 1
      %v1802 = vor.u32 %v1722, %v1801
      %v1803 = vrot.slane %v1732, 1
      %v1804 = vor.u32 %v1729, %v1803
      %v1805 = vrot.slane %v1739, 1
      %v1806 = vor.u32 %v1736, %v1805
      %v1807 = vrot.slane %v1746, 1
      %v1808 = vor.u32 %v1743, %v1807
      %v1824 = vsel %vm665, %v1780, 0
      %v1825 = vsel %vm665, %v1782, 0
      %v1826 = vsel %vm665, %v1784, 0
      %v1827 = vsel %vm665, %v1786, 0
      %v1828 = vsel %vm665, %v1788, 0
      %v1829 = vsel %vm665, %v1790, 0
      %v1830 = vsel %vm665, %v1792, 0
      %v1831 = vsel %vm665, %v1794, 0
      %v1832 = vsel %vm665, %v1796, 0
      %v1833 = vsel %vm665, %v1798, 0
      %v1834 = vsel %vm665, %v1800, 0
      %v1835 = vsel %vm665, %v1802, 0
      %v1836 = vsel %vm665, %v1804, 0
      %v1837 = vsel %vm665, %v1806, 0
      %v1838 = vsel %vm665, %v1808, 0
      %v1841 = vunpack.c.l.b16 %v1567
      %v1842 = vunpack.c.l.b16 %v1568
      %v1843 = vpack.c.b16 %v1842, %v1841
      %v1845 = vshrl.u32 %v1843, 16
      %v1847 = vrot.slane %v1845, 7
      %v1848 = vshll.u32 %v1843, 16
      %v1850 = vor.u32 %v1847, %v1848
      %v1852 = vsel %vm598, 0, %v1850
      %v1853 = vrot.slane %v1848, 1
      %v1854 = vor.u32 %v1845, %v1853
      %v1856 = vsel %vm665, %v1854, 0
      %1857 = vrot.lane.b32.xlu0 0, 8
      %v1858 = vpop.permute.xlu0 %1857
      %1859 = vrot.lane.b32.xlu0 %v1629, 8
      %v1860 = vpop.permute.xlu0 %1859
      %1861 = vrot.lane.b32.xlu0 %v1630, 8
      %v1862 = vpop.permute.xlu0 %1861
      %1863 = vrot.lane.b32.xlu0 %v1631, 8
      %v1864 = vpop.permute.xlu0 %1863
      %1865 = vrot.lane.b32.xlu0 %v1632, 8
      %v1866 = vpop.permute.xlu0 %1865
      %1867 = vrot.lane.b32.xlu0 %v1633, 8
      %v1868 = vpop.permute.xlu0 %1867
      %1869 = vrot.lane.b32.xlu0 %v1634, 8
      %v1870 = vpop.permute.xlu0 %1869
      %1871 = vrot.lane.b32.xlu0 %v1635, 8
      %v1872 = vpop.permute.xlu0 %1871
      %1873 = vrot.lane.b32.xlu0 %v1636, 8
      %v1874 = vpop.permute.xlu0 %1873
      %1875 = vrot.lane.b32.xlu0 %v1637, 8
      %v1876 = vpop.permute.xlu0 %1875
      %1877 = vrot.lane.b32.xlu0 %v1638, 8
      %v1878 = vpop.permute.xlu0 %1877
      %1879 = vrot.lane.b32.xlu0 %v1639, 8
      %v1880 = vpop.permute.xlu0 %1879
      %1881 = vrot.lane.b32.xlu0 %v1640, 8
      %v1882 = vpop.permute.xlu0 %1881
      %1883 = vrot.lane.b32.xlu0 %v1641, 8
      %v1884 = vpop.permute.xlu0 %1883
      %1885 = vrot.lane.b32.xlu0 %v1642, 8
      %v1886 = vpop.permute.xlu0 %1885
      %1887 = vrot.lane.b32.xlu0 %v1643, 8
      %v1888 = vpop.permute.xlu0 %1887
      %1904 = vrot.lane.b32.xlu0 %v666, 16
      %v1905 = vpop.permute.xlu0 %1904
      %1906 = vrot.lane.b32.xlu0 %v1824, 16
      %v1907 = vpop.permute.xlu0 %1906
      %1908 = vrot.lane.b32.xlu0 %v1825, 16
      %v1909 = vpop.permute.xlu0 %1908
      %1910 = vrot.lane.b32.xlu0 %v1826, 16
      %v1911 = vpop.permute.xlu0 %1910
      %1912 = vrot.lane.b32.xlu0 %v1827, 16
      %v1913 = vpop.permute.xlu0 %1912
      %1914 = vrot.lane.b32.xlu0 %v1828, 16
      %v1915 = vpop.permute.xlu0 %1914
      %1916 = vrot.lane.b32.xlu0 %v1829, 16
      %v1917 = vpop.permute.xlu0 %1916
      %1918 = vrot.lane.b32.xlu0 %v1830, 16
      %v1919 = vpop.permute.xlu0 %1918
      %1920 = vrot.lane.b32.xlu0 %v1831, 16
      %v1921 = vpop.permute.xlu0 %1920
      %1922 = vrot.lane.b32.xlu0 %v1832, 16
      %v1923 = vpop.permute.xlu0 %1922
      %1924 = vrot.lane.b32.xlu0 %v1833, 16
      %v1925 = vpop.permute.xlu0 %1924
      %1926 = vrot.lane.b32.xlu0 %v1834, 16
      %v1927 = vpop.permute.xlu0 %1926
      %1928 = vrot.lane.b32.xlu0 %v1835, 16
      %v1929 = vpop.permute.xlu0 %1928
      %1930 = vrot.lane.b32.xlu0 %v1836, 16
      %v1931 = vpop.permute.xlu0 %1930
      %1932 = vrot.lane.b32.xlu0 %v1837, 16
      %v1933 = vpop.permute.xlu0 %1932
      %1934 = vrot.lane.b32.xlu0 %v1838, 16
      %v1935 = vpop.permute.xlu0 %1934
      %1952 = vrot.lane.b32.xlu0 %v1764, 24
      %v1953 = vpop.permute.xlu0 %1952
      %1954 = vrot.lane.b32.xlu0 %v1765, 24
      %v1955 = vpop.permute.xlu0 %1954
      %1956 = vrot.lane.b32.xlu0 %v1766, 24
      %v1957 = vpop.permute.xlu0 %1956
      %1958 = vrot.lane.b32.xlu0 %v1767, 24
      %v1959 = vpop.permute.xlu0 %1958
      %1960 = vrot.lane.b32.xlu0 %v1768, 24
      %v1961 = vpop.permute.xlu0 %1960
      %1962 = vrot.lane.b32.xlu0 %v1769, 24
      %v1963 = vpop.permute.xlu0 %1962
      %1964 = vrot.lane.b32.xlu0 %v1770, 24
      %v1965 = vpop.permute.xlu0 %1964
      %1966 = vrot.lane.b32.xlu0 %v1771, 24
      %v1967 = vpop.permute.xlu0 %1966
      %1968 = vrot.lane.b32.xlu0 %v1772, 24
      %v1969 = vpop.permute.xlu0 %1968
      %1970 = vrot.lane.b32.xlu0 %v1773, 24
      %v1971 = vpop.permute.xlu0 %1970
      %1972 = vrot.lane.b32.xlu0 %v1774, 24
      %v1973 = vpop.permute.xlu0 %1972
      %1974 = vrot.lane.b32.xlu0 %v1775, 24
      %v1975 = vpop.permute.xlu0 %1974
      %1976 = vrot.lane.b32.xlu0 %v1776, 24
      %v1977 = vpop.permute.xlu0 %1976
      %1978 = vrot.lane.b32.xlu0 %v1777, 24
      %v1979 = vpop.permute.xlu0 %1978
      %1980 = vrot.lane.b32.xlu0 %v1778, 24
      %v1981 = vpop.permute.xlu0 %1980
      %1982 = vrot.lane.b32.xlu0 %v1852, 24
      %v1983 = vpop.permute.xlu0 %1982
      %1984 = vrot.lane.b32.xlu0 %v1629, 32
      %v1985 = vpop.permute.xlu0 %1984
      %1986 = vrot.lane.b32.xlu0 %v1630, 32
      %v1987 = vpop.permute.xlu0 %1986
      %1988 = vrot.lane.b32.xlu0 %v1631, 32
      %v1989 = vpop.permute.xlu0 %1988
      %1990 = vrot.lane.b32.xlu0 %v1632, 32
      %v1991 = vpop.permute.xlu0 %1990
      %1992 = vrot.lane.b32.xlu0 %v1633, 32
      %v1993 = vpop.permute.xlu0 %1992
      %1994 = vrot.lane.b32.xlu0 %v1634, 32
      %v1995 = vpop.permute.xlu0 %1994
      %1996 = vrot.lane.b32.xlu0 %v1635, 32
      %v1997 = vpop.permute.xlu0 %1996
      %1998 = vrot.lane.b32.xlu0 %v1636, 32
      %v1999 = vpop.permute.xlu0 %1998
      %2000 = vrot.lane.b32.xlu0 %v1637, 32
      %v2001 = vpop.permute.xlu0 %2000
      %2002 = vrot.lane.b32.xlu0 %v1638, 32
      %v2003 = vpop.permute.xlu0 %2002
      %2004 = vrot.lane.b32.xlu0 %v1639, 32
      %v2005 = vpop.permute.xlu0 %2004
      %2006 = vrot.lane.b32.xlu0 %v1640, 32
      %v2007 = vpop.permute.xlu0 %2006
      %2008 = vrot.lane.b32.xlu0 %v1641, 32
      %v2009 = vpop.permute.xlu0 %2008
      %2010 = vrot.lane.b32.xlu0 %v1642, 32
      %v2011 = vpop.permute.xlu0 %2010
      %2012 = vrot.lane.b32.xlu0 %v1643, 32
      %v2013 = vpop.permute.xlu0 %2012
      %2014 = vrot.lane.b32.xlu0 %v1843, 32
      %v2015 = vpop.permute.xlu0 %2014
      %2017 = vrot.lane.b32.xlu0 %v1824, 40
      %v2018 = vpop.permute.xlu0 %2017
      %2019 = vrot.lane.b32.xlu0 %v1825, 40
      %v2020 = vpop.permute.xlu0 %2019
      %2021 = vrot.lane.b32.xlu0 %v1826, 40
      %v2022 = vpop.permute.xlu0 %2021
      %2023 = vrot.lane.b32.xlu0 %v1827, 40
      %v2024 = vpop.permute.xlu0 %2023
      %2025 = vrot.lane.b32.xlu0 %v1828, 40
      %v2026 = vpop.permute.xlu0 %2025
      %2027 = vrot.lane.b32.xlu0 %v1829, 40
      %v2028 = vpop.permute.xlu0 %2027
      %2029 = vrot.lane.b32.xlu0 %v1830, 40
      %v2030 = vpop.permute.xlu0 %2029
      %2031 = vrot.lane.b32.xlu0 %v1831, 40
      %v2032 = vpop.permute.xlu0 %2031
      %2033 = vrot.lane.b32.xlu0 %v1832, 40
      %v2034 = vpop.permute.xlu0 %2033
      %2035 = vrot.lane.b32.xlu0 %v1833, 40
      %v2036 = vpop.permute.xlu0 %2035
      %2037 = vrot.lane.b32.xlu0 %v1834, 40
      %v2038 = vpop.permute.xlu0 %2037
      %2039 = vrot.lane.b32.xlu0 %v1835, 40
      %v2040 = vpop.permute.xlu0 %2039
      %2041 = vrot.lane.b32.xlu0 %v1836, 40
      %v2042 = vpop.permute.xlu0 %2041
      %2043 = vrot.lane.b32.xlu0 %v1837, 40
      %v2044 = vpop.permute.xlu0 %2043
      %2045 = vrot.lane.b32.xlu0 %v1838, 40
      %v2046 = vpop.permute.xlu0 %2045
      %2047 = vrot.lane.b32.xlu0 %v1856, 40
      %v2048 = vpop.permute.xlu0 %2047
      %2049 = vrot.lane.b32.xlu0 %v1765, 48
      %v2050 = vpop.permute.xlu0 %2049
      %2051 = vrot.lane.b32.xlu0 %v1766, 48
      %v2052 = vpop.permute.xlu0 %2051
      %2053 = vrot.lane.b32.xlu0 %v1767, 48
      %v2054 = vpop.permute.xlu0 %2053
      %2055 = vrot.lane.b32.xlu0 %v1768, 48
      %v2056 = vpop.permute.xlu0 %2055
      %2057 = vrot.lane.b32.xlu0 %v1769, 48
      %v2058 = vpop.permute.xlu0 %2057
      %2059 = vrot.lane.b32.xlu0 %v1770, 48
      %v2060 = vpop.permute.xlu0 %2059
      %2061 = vrot.lane.b32.xlu0 %v1771, 48
      %v2062 = vpop.permute.xlu0 %2061
      %2063 = vrot.lane.b32.xlu0 %v1772, 48
      %v2064 = vpop.permute.xlu0 %2063
      %2065 = vrot.lane.b32.xlu0 %v1773, 48
      %v2066 = vpop.permute.xlu0 %2065
      %2067 = vrot.lane.b32.xlu0 %v1774, 48
      %v2068 = vpop.permute.xlu0 %2067
      %2069 = vrot.lane.b32.xlu0 %v1775, 48
      %v2070 = vpop.permute.xlu0 %2069
      %2071 = vrot.lane.b32.xlu0 %v1776, 48
      %v2072 = vpop.permute.xlu0 %2071
      %2073 = vrot.lane.b32.xlu0 %v1777, 48
      %v2074 = vpop.permute.xlu0 %2073
      %2075 = vrot.lane.b32.xlu0 %v1778, 48
      %v2076 = vpop.permute.xlu0 %2075
      %2077 = vrot.lane.b32.xlu0 %v1852, 48
      %v2078 = vpop.permute.xlu0 %2077
      %2079 = vrot.lane.b32.xlu0 %v711, 48
      %v2080 = vpop.permute.xlu0 %2079
      %2081 = vrot.lane.b32.xlu0 %v1630, 56
      %v2082 = vpop.permute.xlu0 %2081
      %2083 = vrot.lane.b32.xlu0 %v1631, 56
      %v2084 = vpop.permute.xlu0 %2083
      %2085 = vrot.lane.b32.xlu0 %v1632, 56
      %v2086 = vpop.permute.xlu0 %2085
      %2087 = vrot.lane.b32.xlu0 %v1633, 56
      %v2088 = vpop.permute.xlu0 %2087
      %2089 = vrot.lane.b32.xlu0 %v1634, 56
      %v2090 = vpop.permute.xlu0 %2089
      %2091 = vrot.lane.b32.xlu0 %v1635, 56
      %v2092 = vpop.permute.xlu0 %2091
      %2093 = vrot.lane.b32.xlu0 %v1636, 56
      %v2094 = vpop.permute.xlu0 %2093
      %2095 = vrot.lane.b32.xlu0 %v1637, 56
      %v2096 = vpop.permute.xlu0 %2095
      %2097 = vrot.lane.b32.xlu0 %v1638, 56
      %v2098 = vpop.permute.xlu0 %2097
      %2099 = vrot.lane.b32.xlu0 %v1639, 56
      %v2100 = vpop.permute.xlu0 %2099
      %2101 = vrot.lane.b32.xlu0 %v1640, 56
      %v2102 = vpop.permute.xlu0 %2101
      %2103 = vrot.lane.b32.xlu0 %v1641, 56
      %v2104 = vpop.permute.xlu0 %2103
      %2105 = vrot.lane.b32.xlu0 %v1642, 56
      %v2106 = vpop.permute.xlu0 %2105
      %2107 = vrot.lane.b32.xlu0 %v1643, 56
      %v2108 = vpop.permute.xlu0 %2107
      %2109 = vrot.lane.b32.xlu0 %v1843, 56
      %v2110 = vpop.permute.xlu0 %2109
      %2111 = vrot.lane.b32.xlu0 %v702, 56
      %v2112 = vpop.permute.xlu0 %2111
      %2113 = vrot.lane.b32.xlu0 %v1825, 64
      %v2114 = vpop.permute.xlu0 %2113
      %2115 = vrot.lane.b32.xlu0 %v1826, 64
      %v2116 = vpop.permute.xlu0 %2115
      %2117 = vrot.lane.b32.xlu0 %v1827, 64
      %v2118 = vpop.permute.xlu0 %2117
      %2119 = vrot.lane.b32.xlu0 %v1828, 64
      %v2120 = vpop.permute.xlu0 %2119
      %2121 = vrot.lane.b32.xlu0 %v1829, 64
      %v2122 = vpop.permute.xlu0 %2121
      %2123 = vrot.lane.b32.xlu0 %v1830, 64
      %v2124 = vpop.permute.xlu0 %2123
      %2125 = vrot.lane.b32.xlu0 %v1831, 64
      %v2126 = vpop.permute.xlu0 %2125
      %2127 = vrot.lane.b32.xlu0 %v1832, 64
      %v2128 = vpop.permute.xlu0 %2127
      %2129 = vrot.lane.b32.xlu0 %v1833, 64
      %v2130 = vpop.permute.xlu0 %2129
      %2131 = vrot.lane.b32.xlu0 %v1834, 64
      %v2132 = vpop.permute.xlu0 %2131
      %2133 = vrot.lane.b32.xlu0 %v1835, 64
      %v2134 = vpop.permute.xlu0 %2133
      %2135 = vrot.lane.b32.xlu0 %v1836, 64
      %v2136 = vpop.permute.xlu0 %2135
      %2137 = vrot.lane.b32.xlu0 %v1837, 64
      %v2138 = vpop.permute.xlu0 %2137
      %2139 = vrot.lane.b32.xlu0 %v1838, 64
      %v2140 = vpop.permute.xlu0 %2139
      %2141 = vrot.lane.b32.xlu0 %v1856, 64
      %v2142 = vpop.permute.xlu0 %2141
      %2143 = vrot.lane.b32.xlu0 %v715, 64
      %v2144 = vpop.permute.xlu0 %2143
      %v2146 = vsel %vm1056, %v599, %v1858
      %v2149 = vsel %vm1056, %v1764, %v1860
      %v2152 = vsel %vm1056, %v1765, %v1862
      %v2155 = vsel %vm1056, %v1766, %v1864
      %v2158 = vsel %vm1056, %v1767, %v1866
      %v2161 = vsel %vm1056, %v1768, %v1868
      %v2164 = vsel %vm1056, %v1769, %v1870
      %v2167 = vsel %vm1056, %v1770, %v1872
      %v2170 = vsel %vm1056, %v1771, %v1874
      %v2173 = vsel %vm1056, %v1772, %v1876
      %v2176 = vsel %vm1056, %v1773, %v1878
      %v2179 = vsel %vm1056, %v1774, %v1880
      %v2182 = vsel %vm1056, %v1775, %v1882
      %v2185 = vsel %vm1056, %v1776, %v1884
      %v2188 = vsel %vm1056, %v1777, %v1886
      %v2191 = vsel %vm1056, %v1778, %v1888
      %v2193 = vsel %vm1122, %v2146, %v1905
      %v2195 = vsel %vm1122, %v2149, %v1907
      %v2197 = vsel %vm1122, %v2152, %v1909
      %v2199 = vsel %vm1122, %v2155, %v1911
      %v2201 = vsel %vm1122, %v2158, %v1913
      %v2203 = vsel %vm1122, %v2161, %v1915
      %v2205 = vsel %vm1122, %v2164, %v1917
      %v2207 = vsel %vm1122, %v2167, %v1919
      %v2209 = vsel %vm1122, %v2170, %v1921
      %v2211 = vsel %vm1122, %v2173, %v1923
      %v2213 = vsel %vm1122, %v2176, %v1925
      %v2215 = vsel %vm1122, %v2179, %v1927
      %v2217 = vsel %vm1122, %v2182, %v1929
      %v2219 = vsel %vm1122, %v2185, %v1931
      %v2221 = vsel %vm1122, %v2188, %v1933
      %v2223 = vsel %vm1122, %v2191, %v1935
      %v2225 = vsel %vm1188, %v2193, %v1953
      %v2227 = vsel %vm1188, %v2195, %v1955
      %v2229 = vsel %vm1188, %v2197, %v1957
      %v2231 = vsel %vm1188, %v2199, %v1959
      %v2233 = vsel %vm1188, %v2201, %v1961
      %v2235 = vsel %vm1188, %v2203, %v1963
      %v2237 = vsel %vm1188, %v2205, %v1965
      %v2239 = vsel %vm1188, %v2207, %v1967
      %v2241 = vsel %vm1188, %v2209, %v1969
      %v2243 = vsel %vm1188, %v2211, %v1971
      %v2245 = vsel %vm1188, %v2213, %v1973
      %v2247 = vsel %vm1188, %v2215, %v1975
      %v2249 = vsel %vm1188, %v2217, %v1977
      %v2251 = vsel %vm1188, %v2219, %v1979
      %v2253 = vsel %vm1188, %v2221, %v1981
      %v2255 = vsel %vm1188, %v2223, %v1983
      %v2257 = vsel %vm1254, %v2225, %v1985
      %v2259 = vsel %vm1254, %v2227, %v1987
      %v2261 = vsel %vm1254, %v2229, %v1989
      %v2263 = vsel %vm1254, %v2231, %v1991
      %v2265 = vsel %vm1254, %v2233, %v1993
      %v2267 = vsel %vm1254, %v2235, %v1995
      %v2269 = vsel %vm1254, %v2237, %v1997
      %v2271 = vsel %vm1254, %v2239, %v1999
      %v2273 = vsel %vm1254, %v2241, %v2001
      %v2275 = vsel %vm1254, %v2243, %v2003
      %v2277 = vsel %vm1254, %v2245, %v2005
      %v2279 = vsel %vm1254, %v2247, %v2007
      %v2281 = vsel %vm1254, %v2249, %v2009
      %v2283 = vsel %vm1254, %v2251, %v2011
      %v2285 = vsel %vm1254, %v2253, %v2013
      %v2287 = vsel %vm1254, %v2255, %v2015
      %vm2288 = vcmask 326656
      %v2290 = vsel %vm2288, %v2257, %v2018
      %v2292 = vsel %vm2288, %v2259, %v2020
      %v2294 = vsel %vm2288, %v2261, %v2022
      %v2296 = vsel %vm2288, %v2263, %v2024
      %v2298 = vsel %vm2288, %v2265, %v2026
      %v2300 = vsel %vm2288, %v2267, %v2028
      %v2302 = vsel %vm2288, %v2269, %v2030
      %v2304 = vsel %vm2288, %v2271, %v2032
      %v2306 = vsel %vm2288, %v2273, %v2034
      %v2308 = vsel %vm2288, %v2275, %v2036
      %v2310 = vsel %vm2288, %v2277, %v2038
      %v2312 = vsel %vm2288, %v2279, %v2040
      %v2314 = vsel %vm2288, %v2281, %v2042
      %v2316 = vsel %vm2288, %v2283, %v2044
      %v2318 = vsel %vm2288, %v2285, %v2046
      %v2320 = vsel %vm2288, %v2287, %v2048
      %vm2321 = vcmask 392192
      %v2323 = vsel %vm2321, %v2290, %v2050
      %v2325 = vsel %vm2321, %v2292, %v2052
      %v2327 = vsel %vm2321, %v2294, %v2054
      %v2329 = vsel %vm2321, %v2296, %v2056
      %v2331 = vsel %vm2321, %v2298, %v2058
      %v2333 = vsel %vm2321, %v2300, %v2060
      %v2335 = vsel %vm2321, %v2302, %v2062
      %v2337 = vsel %vm2321, %v2304, %v2064
      %v2339 = vsel %vm2321, %v2306, %v2066
      %v2341 = vsel %vm2321, %v2308, %v2068
      %v2343 = vsel %vm2321, %v2310, %v2070
      %v2345 = vsel %vm2321, %v2312, %v2072
      %v2347 = vsel %vm2321, %v2314, %v2074
      %v2349 = vsel %vm2321, %v2316, %v2076
      %v2351 = vsel %vm2321, %v2318, %v2078
      %v2353 = vsel %vm2321, %v2320, %v2080
      %vm2354 = vcmask 457728
      %v2356 = vsel %vm2354, %v2323, %v2082
      %v2358 = vsel %vm2354, %v2325, %v2084
      %v2360 = vsel %vm2354, %v2327, %v2086
      %v2362 = vsel %vm2354, %v2329, %v2088
      %v2364 = vsel %vm2354, %v2331, %v2090
      %v2366 = vsel %vm2354, %v2333, %v2092
      %v2368 = vsel %vm2354, %v2335, %v2094
      %v2370 = vsel %vm2354, %v2337, %v2096
      %v2372 = vsel %vm2354, %v2339, %v2098
      %v2374 = vsel %vm2354, %v2341, %v2100
      %v2376 = vsel %vm2354, %v2343, %v2102
      %v2378 = vsel %vm2354, %v2345, %v2104
      %v2380 = vsel %vm2354, %v2347, %v2106
      %v2382 = vsel %vm2354, %v2349, %v2108
      %v2384 = vsel %vm2354, %v2351, %v2110
      %v2386 = vsel %vm2354, %v2353, %v2112
      %vm2387 = vcmask 523264
      %v2389 = vsel %vm2387, %v2356, %v2114
      %v2391 = vsel %vm2387, %v2358, %v2116
      %v2393 = vsel %vm2387, %v2360, %v2118
      %v2395 = vsel %vm2387, %v2362, %v2120
      %v2397 = vsel %vm2387, %v2364, %v2122
      %v2399 = vsel %vm2387, %v2366, %v2124
      %v2401 = vsel %vm2387, %v2368, %v2126
      %v2403 = vsel %vm2387, %v2370, %v2128
      %v2405 = vsel %vm2387, %v2372, %v2130
      %v2407 = vsel %vm2387, %v2374, %v2132
      %v2409 = vsel %vm2387, %v2376, %v2134
      %v2411 = vsel %vm2387, %v2378, %v2136
      %v2413 = vsel %vm2387, %v2380, %v2138
      %v2415 = vsel %vm2387, %v2382, %v2140
      %v2417 = vsel %vm2387, %v2384, %v2142
      %v2419 = vsel %vm2387, %v2386, %v2144
      %v2420 = vld [vmem:[%s4] sm:$0xf]
      %v2421 = vld [vmem:[%s4 + $0x4] sm:$0xf]
      %v2422 = vld [vmem:[%s4 + $0x8] sm:$0xf]
      %v2423 = vld [vmem:[%s4 + $0xc] sm:$0xf]
      %v2424 = vld [vmem:[%s4 + $0x10] sm:$0xf]
      %v2425 = vld [vmem:[%s4 + $0x14] sm:$0xf]
      %v2426 = vld [vmem:[%s4 + $0x18] sm:$0xf]
      %v2427 = vld [vmem:[%s4 + $0x1c] sm:$0xf]
      %v2428 = vld [vmem:[%s4 + $0x20] sm:$0xf]
      %v2438 = vunpack.c.l.b16 %v2420
      %v2439 = vunpack.c.l.b16 %v2421
      %v2440 = vunpack.c.l.b16 %v2422
      %v2441 = vunpack.c.l.b16 %v2423
      %v2442 = vunpack.c.l.b16 %v2424
      %v2443 = vunpack.c.l.b16 %v2425
      %v2444 = vunpack.c.l.b16 %v2426
      %v2445 = vunpack.c.l.b16 %v2427
      %v2446 = vunpack.c.l.b16 %v2428
      %v2447 = vpack.c.b16 %v2439, %v2438
      %v2448 = vpack.c.b16 %v2441, %v2440
      %v2449 = vpack.c.b16 %v2443, %v2442
      %v2450 = vpack.c.b16 %v2445, %v2444
      %v2451 = vpack.c.b16 %v2446, %v2446
      %vm2456 = vcmask 588800
      %v2457 = vsel %vm2456, %v2389, 0
      %v2459 = vsel %vm2456, %v2391, 0
      %v2461 = vsel %vm2456, %v2393, 0
      %v2463 = vsel %vm2456, %v2395, 0
      %v2465 = vsel %vm2456, %v2397, 0
      %v2467 = vsel %vm2456, %v2399, 0
      %v2469 = vsel %vm2456, %v2401, 0
      %v2471 = vsel %vm2456, %v2403, 0
      %v2473 = vsel %vm2456, %v2405, 0
      %v2475 = vsel %vm2456, %v2407, 0
      %v2477 = vsel %vm2456, %v2409, 0
      %v2479 = vsel %vm2456, %v2411, 0
      %v2481 = vsel %vm2456, %v2413, 0
      %v2483 = vsel %vm2456, %v2415, 0
      %v2485 = vsel %vm2456, %v2417, 0
      %v2487 = vsel %vm2456, %v2419, 0
      %vm2489 = vcmask 1043456
      %v2491 = vsel %vm2489, %v2451, 0
      %2493 = vmatpush.bf16.msra.mxu0 0
      %2494 = vmatpush.bf16.msra.mxu0 0
      %2495 = vmatpush.bf16.msra.mxu0 0
      %2496 = vmatpush.bf16.msra.mxu0 %v2491
      %2497 = vmatpush.bf16.msra.mxu0 %v2450
      %2498 = vmatpush.bf16.msra.mxu0 %v2449
      %2499 = vmatpush.bf16.msra.mxu0 %v2448
      %2500 = vmatpush.bf16.msra.mxu0 %v2447
      %2501 = vmatmul.bf16.gmra.mxu0 %v2457
      %v2502 = vpop.f32.mrf.mxu0
      %v2503 = vadd.f32 0.0, %v2502
      %v2504 = vpop.f32.mrf.mxu0
      %v2505 = vadd.f32 0.0, %v2504
      %2506 = vmatmul.bf16.gmra.mxu0 %v2459
      %v2507 = vpop.f32.mrf.mxu0
      %v2508 = vadd.f32 0.0, %v2507
      %v2509 = vpop.f32.mrf.mxu0
      %v2510 = vadd.f32 0.0, %v2509
      %2511 = vmatmul.bf16.gmra.mxu0 %v2461
      %v2512 = vpop.f32.mrf.mxu0
      %v2513 = vadd.f32 0.0, %v2512
      %v2514 = vpop.f32.mrf.mxu0
      %v2515 = vadd.f32 0.0, %v2514
      %2516 = vmatmul.bf16.gmra.mxu0 %v2463
      %v2517 = vpop.f32.mrf.mxu0
      %v2518 = vadd.f32 0.0, %v2517
      %v2519 = vpop.f32.mrf.mxu0
      %v2520 = vadd.f32 0.0, %v2519
      %2521 = vmatmul.bf16.gmra.mxu0 %v2465
      %v2522 = vpop.f32.mrf.mxu0
      %v2523 = vadd.f32 0.0, %v2522
      %v2524 = vpop.f32.mrf.mxu0
      %v2525 = vadd.f32 0.0, %v2524
      %2526 = vmatmul.bf16.gmra.mxu0 %v2467
      %v2527 = vpop.f32.mrf.mxu0
      %v2528 = vadd.f32 0.0, %v2527
      %v2529 = vpop.f32.mrf.mxu0
      %v2530 = vadd.f32 0.0, %v2529
      %2531 = vmatmul.bf16.gmra.mxu0 %v2469
      %v2532 = vpop.f32.mrf.mxu0
      %v2533 = vadd.f32 0.0, %v2532
      %v2534 = vpop.f32.mrf.mxu0
      %v2535 = vadd.f32 0.0, %v2534
      %2536 = vmatmul.bf16.gmra.mxu0 %v2471
      %v2537 = vpop.f32.mrf.mxu0
      %v2538 = vadd.f32 0.0, %v2537
      %v2539 = vpop.f32.mrf.mxu0
      %v2540 = vadd.f32 0.0, %v2539
      %2541 = vmatmul.bf16.gmra.mxu0 %v2473
      %v2542 = vpop.f32.mrf.mxu0
      %v2543 = vadd.f32 0.0, %v2542
      %v2544 = vpop.f32.mrf.mxu0
      %v2545 = vadd.f32 0.0, %v2544
      %2546 = vmatmul.bf16.gmra.mxu0 %v2475
      %v2547 = vpop.f32.mrf.mxu0
      %v2548 = vadd.f32 0.0, %v2547
      %v2549 = vpop.f32.mrf.mxu0
      %v2550 = vadd.f32 0.0, %v2549
      %2551 = vmatmul.bf16.gmra.mxu0 %v2477
      %v2552 = vpop.f32.mrf.mxu0
      %v2553 = vadd.f32 0.0, %v2552
      %v2554 = vpop.f32.mrf.mxu0
      %v2555 = vadd.f32 0.0, %v2554
      %2556 = vmatmul.bf16.gmra.mxu0 %v2479
      %v2557 = vpop.f32.mrf.mxu0
      %v2558 = vadd.f32 0.0, %v2557
      %v2559 = vpop.f32.mrf.mxu0
      %v2560 = vadd.f32 0.0, %v2559
      %2561 = vmatmul.bf16.gmra.mxu0 %v2481
      %v2562 = vpop.f32.mrf.mxu0
      %v2563 = vadd.f32 0.0, %v2562
      %v2564 = vpop.f32.mrf.mxu0
      %v2565 = vadd.f32 0.0, %v2564
      %2566 = vmatmul.bf16.gmra.mxu0 %v2483
      %v2567 = vpop.f32.mrf.mxu0
      %v2568 = vadd.f32 0.0, %v2567
      %v2569 = vpop.f32.mrf.mxu0
      %v2570 = vadd.f32 0.0, %v2569
      %2571 = vmatmul.bf16.gmra.mxu0 %v2485
      %v2572 = vpop.f32.mrf.mxu0
      %v2573 = vadd.f32 0.0, %v2572
      %v2574 = vpop.f32.mrf.mxu0
      %v2575 = vadd.f32 0.0, %v2574
      %2576 = vmatmul.bf16.gmra.mxu0 %v2487
      %v2577 = vpop.f32.mrf.mxu0
      %v2578 = vadd.f32 0.0, %v2577
      %v2579 = vpop.f32.mrf.mxu0
      %v2580 = vadd.f32 0.0, %v2579
      %2581 = vdwg.mxu0
      %v2582 = vld [vmem:[%s5] sm:$0x1]
      %v2584 = vperm.slane %v2582, 0
      %v2586 = vmul.f32 %v2503, %v2584
      %v2587 = vmul.f32 %v2505, %v2584
      %v2588 = vmul.f32 %v2508, %v2584
      %v2589 = vmul.f32 %v2510, %v2584
      %v2590 = vmul.f32 %v2513, %v2584
      %v2591 = vmul.f32 %v2515, %v2584
      %v2592 = vmul.f32 %v2518, %v2584
      %v2593 = vmul.f32 %v2520, %v2584
      %v2594 = vmul.f32 %v2523, %v2584
      %v2595 = vmul.f32 %v2525, %v2584
      %v2596 = vmul.f32 %v2528, %v2584
      %v2597 = vmul.f32 %v2530, %v2584
      %v2598 = vmul.f32 %v2533, %v2584
      %v2599 = vmul.f32 %v2535, %v2584
      %v2600 = vmul.f32 %v2538, %v2584
      %v2601 = vmul.f32 %v2540, %v2584
      %v2602 = vmul.f32 %v2543, %v2584
      %v2603 = vmul.f32 %v2545, %v2584
      %v2604 = vmul.f32 %v2548, %v2584
      %v2605 = vmul.f32 %v2550, %v2584
      %v2606 = vmul.f32 %v2553, %v2584
      %v2607 = vmul.f32 %v2555, %v2584
      %v2608 = vmul.f32 %v2558, %v2584
      %v2609 = vmul.f32 %v2560, %v2584
      %v2610 = vmul.f32 %v2563, %v2584
      %v2611 = vmul.f32 %v2565, %v2584
      %v2612 = vmul.f32 %v2568, %v2584
      %v2613 = vmul.f32 %v2570, %v2584
      %v2614 = vmul.f32 %v2573, %v2584
      %v2615 = vmul.f32 %v2575, %v2584
      %v2616 = vmul.f32 %v2578, %v2584
      %v2617 = vmul.f32 %v2580, %v2584
      %v2618 = vld [vmem:[%s6] sm:$0x1]
      %v2620 = vperm.slane %v2618, 0
      %v2622 = vadd.f32 %v2586, %v2620
      %v2623 = vadd.f32 %v2587, %v2620
      %v2624 = vadd.f32 %v2588, %v2620
      %v2625 = vadd.f32 %v2589, %v2620
      %v2626 = vadd.f32 %v2590, %v2620
      %v2627 = vadd.f32 %v2591, %v2620
      %v2628 = vadd.f32 %v2592, %v2620
      %v2629 = vadd.f32 %v2593, %v2620
      %v2630 = vadd.f32 %v2594, %v2620
      %v2631 = vadd.f32 %v2595, %v2620
      %v2632 = vadd.f32 %v2596, %v2620
      %v2633 = vadd.f32 %v2597, %v2620
      %v2634 = vadd.f32 %v2598, %v2620
      %v2635 = vadd.f32 %v2599, %v2620
      %v2636 = vadd.f32 %v2600, %v2620
      %v2637 = vadd.f32 %v2601, %v2620
      %v2638 = vadd.f32 %v2602, %v2620
      %v2639 = vadd.f32 %v2603, %v2620
      %v2640 = vadd.f32 %v2604, %v2620
      %v2641 = vadd.f32 %v2605, %v2620
      %v2642 = vadd.f32 %v2606, %v2620
      %v2643 = vadd.f32 %v2607, %v2620
      %v2644 = vadd.f32 %v2608, %v2620
      %v2645 = vadd.f32 %v2609, %v2620
      %v2646 = vadd.f32 %v2610, %v2620
      %v2647 = vadd.f32 %v2611, %v2620
      %v2648 = vadd.f32 %v2612, %v2620
      %v2649 = vadd.f32 %v2613, %v2620
      %v2650 = vadd.f32 %v2614, %v2620
      %v2651 = vadd.f32 %v2615, %v2620
      %v2652 = vadd.f32 %v2616, %v2620
      %v2653 = vadd.f32 %v2617, %v2620
      %v2654 = vld [vmem:[%s7] sm:$0x3]
      %v2655 = vsel %vm1007, %v453, 0
      %v2657 = vsel %vm1007, %v454, 0
      %v2659 = vsel %vm1007, %v455, 0
      %v2661 = vsel %vm1007, %v456, 0
      %v2663 = vsel %vm1007, %v457, 0
      %v2665 = vsel %vm1007, %v458, 0
      %v2667 = vsel %vm1007, %v459, 0
      %v2669 = vsel %vm1007, %v460, 0
      %v2671 = vsel %vm1007, %v461, 0
      %v2673 = vsel %vm1007, %v462, 0
      %v2675 = vsel %vm1007, %v463, 0
      %v2677 = vsel %vm1007, %v464, 0
      %v2679 = vsel %vm1007, %v465, 0
      %v2681 = vsel %vm1007, %v466, 0
      %v2683 = vsel %vm1007, %v467, 0
      %v2685 = vsel %vm1007, %v686, 0
      %v2688 = vsel %vm1340, %v2654, 0
      %2690 = vmatpush.bf16.msra.mxu0 0
      %2691 = vmatpush.bf16.msra.mxu0 0
      %2692 = vmatpush.bf16.msra.mxu0 0
      %2693 = vmatpush.bf16.msra.mxu0 0
      %2694 = vmatpush.bf16.msra.mxu0 0
      %2695 = vmatpush.bf16.msra.mxu0 0
      %2696 = vmatpush.bf16.msra.mxu0 0
      %2697 = vmatpush.bf16.msra.mxu0 %v2688
      %2698 = vmatmul.bf16.gmra.mxu0 %v2655
      %v2699 = vpop.f32.mrf.mxu0
      %v2700 = vadd.f32 0.0, %v2699
      %v2701 = vpop.f32.mrf.mxu0
      %v2702 = vadd.f32 0.0, %v2701
      %2703 = vmatmul.bf16.gmra.mxu0 %v2657
      %v2704 = vpop.f32.mrf.mxu0
      %v2705 = vadd.f32 0.0, %v2704
      %v2706 = vpop.f32.mrf.mxu0
      %v2707 = vadd.f32 0.0, %v2706
      %2708 = vmatmul.bf16.gmra.mxu0 %v2659
      %v2709 = vpop.f32.mrf.mxu0
      %v2710 = vadd.f32 0.0, %v2709
      %v2711 = vpop.f32.mrf.mxu0
      %v2712 = vadd.f32 0.0, %v2711
      %2713 = vmatmul.bf16.gmra.mxu0 %v2661
      %v2714 = vpop.f32.mrf.mxu0
      %v2715 = vadd.f32 0.0, %v2714
      %v2716 = vpop.f32.mrf.mxu0
      %v2717 = vadd.f32 0.0, %v2716
      %2718 = vmatmul.bf16.gmra.mxu0 %v2663
      %v2719 = vpop.f32.mrf.mxu0
      %v2720 = vadd.f32 0.0, %v2719
      %v2721 = vpop.f32.mrf.mxu0
      %v2722 = vadd.f32 0.0, %v2721
      %2723 = vmatmul.bf16.gmra.mxu0 %v2665
      %v2724 = vpop.f32.mrf.mxu0
      %v2725 = vadd.f32 0.0, %v2724
      %v2726 = vpop.f32.mrf.mxu0
      %v2727 = vadd.f32 0.0, %v2726
      %2728 = vmatmul.bf16.gmra.mxu0 %v2667
      %v2729 = vpop.f32.mrf.mxu0
      %v2730 = vadd.f32 0.0, %v2729
      %v2731 = vpop.f32.mrf.mxu0
      %v2732 = vadd.f32 0.0, %v2731
      %2733 = vmatmul.bf16.gmra.mxu0 %v2669
      %v2734 = vpop.f32.mrf.mxu0
      %v2735 = vadd.f32 0.0, %v2734
      %v2736 = vpop.f32.mrf.mxu0
      %v2737 = vadd.f32 0.0, %v2736
      %2738 = vmatmul.bf16.gmra.mxu0 %v2671
      %v2739 = vpop.f32.mrf.mxu0
      %v2740 = vadd.f32 0.0, %v2739
      %v2741 = vpop.f32.mrf.mxu0
      %v2742 = vadd.f32 0.0, %v2741
      %2743 = vmatmul.bf16.gmra.mxu0 %v2673
      %v2744 = vpop.f32.mrf.mxu0
      %v2745 = vadd.f32 0.0, %v2744
      %v2746 = vpop.f32.mrf.mxu0
      %v2747 = vadd.f32 0.0, %v2746
      %2748 = vmatmul.bf16.gmra.mxu0 %v2675
      %v2749 = vpop.f32.mrf.mxu0
      %v2750 = vadd.f32 0.0, %v2749
      %v2751 = vpop.f32.mrf.mxu0
      %v2752 = vadd.f32 0.0, %v2751
      %2753 = vmatmul.bf16.gmra.mxu0 %v2677
      %v2754 = vpop.f32.mrf.mxu0
      %v2755 = vadd.f32 0.0, %v2754
      %v2756 = vpop.f32.mrf.mxu0
      %v2757 = vadd.f32 0.0, %v2756
      %2758 = vmatmul.bf16.gmra.mxu0 %v2679
      %v2759 = vpop.f32.mrf.mxu0
      %v2760 = vadd.f32 0.0, %v2759
      %v2761 = vpop.f32.mrf.mxu0
      %v2762 = vadd.f32 0.0, %v2761
      %2763 = vmatmul.bf16.gmra.mxu0 %v2681
      %v2764 = vpop.f32.mrf.mxu0
      %v2765 = vadd.f32 0.0, %v2764
      %v2766 = vpop.f32.mrf.mxu0
      %v2767 = vadd.f32 0.0, %v2766
      %2768 = vmatmul.bf16.gmra.mxu0 %v2683
      %v2769 = vpop.f32.mrf.mxu0
      %v2770 = vadd.f32 0.0, %v2769
      %v2771 = vpop.f32.mrf.mxu0
      %v2772 = vadd.f32 0.0, %v2771
      %2773 = vmatmul.bf16.gmra.mxu0 %v2685
      %v2774 = vpop.f32.mrf.mxu0
      %v2775 = vadd.f32 0.0, %v2774
      %v2776 = vpop.f32.mrf.mxu0
      %v2777 = vadd.f32 0.0, %v2776
      %2778 = vdwg.mxu0
      %v2779 = vld [vmem:[%s8] sm:$0x1]
      %v2781 = vperm.slane %v2779, 0
      %v2783 = vmul.f32 %v2700, %v2781
      %v2784 = vmul.f32 %v2702, %v2781
      %v2785 = vmul.f32 %v2705, %v2781
      %v2786 = vmul.f32 %v2707, %v2781
      %v2787 = vmul.f32 %v2710, %v2781
      %v2788 = vmul.f32 %v2712, %v2781
      %v2789 = vmul.f32 %v2715, %v2781
      %v2790 = vmul.f32 %v2717, %v2781
      %v2791 = vmul.f32 %v2720, %v2781
      %v2792 = vmul.f32 %v2722, %v2781
      %v2793 = vmul.f32 %v2725, %v2781
      %v2794 = vmul.f32 %v2727, %v2781
      %v2795 = vmul.f32 %v2730, %v2781
      %v2796 = vmul.f32 %v2732, %v2781
      %v2797 = vmul.f32 %v2735, %v2781
      %v2798 = vmul.f32 %v2737, %v2781
      %v2799 = vmul.f32 %v2740, %v2781
      %v2800 = vmul.f32 %v2742, %v2781
      %v2801 = vmul.f32 %v2745, %v2781
      %v2802 = vmul.f32 %v2747, %v2781
      %v2803 = vmul.f32 %v2750, %v2781
      %v2804 = vmul.f32 %v2752, %v2781
      %v2805 = vmul.f32 %v2755, %v2781
      %v2806 = vmul.f32 %v2757, %v2781
      %v2807 = vmul.f32 %v2760, %v2781
      %v2808 = vmul.f32 %v2762, %v2781
      %v2809 = vmul.f32 %v2765, %v2781
      %v2810 = vmul.f32 %v2767, %v2781
      %v2811 = vmul.f32 %v2770, %v2781
      %v2812 = vmul.f32 %v2772, %v2781
      %v2813 = vmul.f32 %v2775, %v2781
      %v2814 = vmul.f32 %v2777, %v2781
      %v2815 = vld [vmem:[%s9] sm:$0x1]
      %v2817 = vperm.slane %v2815, 0
      %v2819 = vadd.f32 %v2783, %v2817
      %v2820 = vadd.f32 %v2784, %v2817
      %v2821 = vadd.f32 %v2785, %v2817
      %v2822 = vadd.f32 %v2786, %v2817
      %v2823 = vadd.f32 %v2787, %v2817
      %v2824 = vadd.f32 %v2788, %v2817
      %v2825 = vadd.f32 %v2789, %v2817
      %v2826 = vadd.f32 %v2790, %v2817
      %v2827 = vadd.f32 %v2791, %v2817
      %v2828 = vadd.f32 %v2792, %v2817
      %v2829 = vadd.f32 %v2793, %v2817
      %v2830 = vadd.f32 %v2794, %v2817
      %v2831 = vadd.f32 %v2795, %v2817
      %v2832 = vadd.f32 %v2796, %v2817
      %v2833 = vadd.f32 %v2797, %v2817
      %v2834 = vadd.f32 %v2798, %v2817
      %v2835 = vadd.f32 %v2799, %v2817
      %v2836 = vadd.f32 %v2800, %v2817
      %v2837 = vadd.f32 %v2801, %v2817
      %v2838 = vadd.f32 %v2802, %v2817
      %v2839 = vadd.f32 %v2803, %v2817
      %v2840 = vadd.f32 %v2804, %v2817
      %v2841 = vadd.f32 %v2805, %v2817
      %v2842 = vadd.f32 %v2806, %v2817
      %v2843 = vadd.f32 %v2807, %v2817
      %v2844 = vadd.f32 %v2808, %v2817
      %v2845 = vadd.f32 %v2809, %v2817
      %v2846 = vadd.f32 %v2810, %v2817
      %v2847 = vadd.f32 %v2811, %v2817
      %v2848 = vadd.f32 %v2812, %v2817
      %v2849 = vadd.f32 %v2813, %v2817
      %v2850 = vadd.f32 %v2814, %v2817
      %v2851 = vadd.f32 %v2622, %v2819
      %v2852 = vadd.f32 %v2623, %v2820
      %v2853 = vadd.f32 %v2624, %v2821
      %v2854 = vadd.f32 %v2625, %v2822
      %v2855 = vadd.f32 %v2626, %v2823
      %v2856 = vadd.f32 %v2627, %v2824
      %v2857 = vadd.f32 %v2628, %v2825
      %v2858 = vadd.f32 %v2629, %v2826
      %v2859 = vadd.f32 %v2630, %v2827
      %v2860 = vadd.f32 %v2631, %v2828
      %v2861 = vadd.f32 %v2632, %v2829
      %v2862 = vadd.f32 %v2633, %v2830
      %v2863 = vadd.f32 %v2634, %v2831
      %v2864 = vadd.f32 %v2635, %v2832
      %v2865 = vadd.f32 %v2636, %v2833
      %v2866 = vadd.f32 %v2637, %v2834
      %v2867 = vadd.f32 %v2638, %v2835
      %v2868 = vadd.f32 %v2639, %v2836
      %v2869 = vadd.f32 %v2640, %v2837
      %v2870 = vadd.f32 %v2641, %v2838
      %v2871 = vadd.f32 %v2642, %v2839
      %v2872 = vadd.f32 %v2643, %v2840
      %v2873 = vadd.f32 %v2644, %v2841
      %v2874 = vadd.f32 %v2645, %v2842
      %v2875 = vadd.f32 %v2646, %v2843
      %v2876 = vadd.f32 %v2647, %v2844
      %v2877 = vadd.f32 %v2648, %v2845
      %v2878 = vadd.f32 %v2649, %v2846
      %v2879 = vadd.f32 %v2650, %v2847
      %v2880 = vadd.f32 %v2651, %v2848
      %v2881 = vadd.f32 %v2652, %v2849
      %v2882 = vadd.f32 %v2653, %v2850
      %v2883 = vmax.f32 %v2851, 0.0
      %v2884 = vmax.f32 %v2852, 0.0
      %v2885 = vmax.f32 %v2853, 0.0
      %v2886 = vmax.f32 %v2854, 0.0
      %v2887 = vmax.f32 %v2855, 0.0
      %v2888 = vmax.f32 %v2856, 0.0
      %v2889 = vmax.f32 %v2857, 0.0
      %v2890 = vmax.f32 %v2858, 0.0
      %v2891 = vmax.f32 %v2859, 0.0
      %v2892 = vmax.f32 %v2860, 0.0
      %v2893 = vmax.f32 %v2861, 0.0
      %v2894 = vmax.f32 %v2862, 0.0
      %v2895 = vmax.f32 %v2863, 0.0
      %v2896 = vmax.f32 %v2864, 0.0
      %v2897 = vmax.f32 %v2865, 0.0
      %v2898 = vmax.f32 %v2866, 0.0
      %v2899 = vmax.f32 %v2867, 0.0
      %v2900 = vmax.f32 %v2868, 0.0
      %v2901 = vmax.f32 %v2869, 0.0
      %v2902 = vmax.f32 %v2870, 0.0
      %v2903 = vmax.f32 %v2871, 0.0
      %v2904 = vmax.f32 %v2872, 0.0
      %v2905 = vmax.f32 %v2873, 0.0
      %v2906 = vmax.f32 %v2874, 0.0
      %v2907 = vmax.f32 %v2875, 0.0
      %v2908 = vmax.f32 %v2876, 0.0
      %v2909 = vmax.f32 %v2877, 0.0
      %v2910 = vmax.f32 %v2878, 0.0
      %v2911 = vmax.f32 %v2879, 0.0
      %v2912 = vmax.f32 %v2880, 0.0
      %v2913 = vmax.f32 %v2881, 0.0
      %v2914 = vmax.f32 %v2882, 0.0
      %2915 = vst.msk [vmem:[%s359] sm:$0xff] %vm1056, %v2883
      %2916 = vst.msk [vmem:[%s359 + $0x8] sm:$0xff] %vm1056, %v2884
      %2917 = vst.msk [vmem:[%s359 + $0x10] sm:$0xff] %vm1056, %v2885
      %2918 = vst.msk [vmem:[%s359 + $0x18] sm:$0xff] %vm1056, %v2886
      %2919 = vst.msk [vmem:[%s359 + $0x20] sm:$0xff] %vm1056, %v2887
      %2920 = vst.msk [vmem:[%s359 + $0x28] sm:$0xff] %vm1056, %v2888
      %2921 = vst.msk [vmem:[%s359 + $0x30] sm:$0xff] %vm1056, %v2889
      %2922 = vst.msk [vmem:[%s359 + $0x38] sm:$0xff] %vm1056, %v2890
      %2923 = vst.msk [vmem:[%s359 + $0x40] sm:$0xff] %vm1056, %v2891
      %2924 = vst.msk [vmem:[%s359 + $0x48] sm:$0xff] %vm1056, %v2892
      %2925 = vst.msk [vmem:[%s359 + $0x50] sm:$0xff] %vm1056, %v2893
      %2926 = vst.msk [vmem:[%s359 + $0x58] sm:$0xff] %vm1056, %v2894
      %2927 = vst.msk [vmem:[%s359 + $0x60] sm:$0xff] %vm1056, %v2895
      %2928 = vst.msk [vmem:[%s359 + $0x68] sm:$0xff] %vm1056, %v2896
      %2929 = vst.msk [vmem:[%s359 + $0x70] sm:$0xff] %vm1056, %v2897
      %2930 = vst.msk [vmem:[%s359 + $0x78] sm:$0xff] %vm1056, %v2898
      %2931 = vst.msk [vmem:[%s359 + $0x80] sm:$0xff] %vm1056, %v2899
      %2932 = vst.msk [vmem:[%s359 + $0x88] sm:$0xff] %vm1056, %v2900
      %2933 = vst.msk [vmem:[%s359 + $0x90] sm:$0xff] %vm1056, %v2901
      %2934 = vst.msk [vmem:[%s359 + $0x98] sm:$0xff] %vm1056, %v2902
      %2935 = vst.msk [vmem:[%s359 + $0xa0] sm:$0xff] %vm1056, %v2903
      %2936 = vst.msk [vmem:[%s359 + $0xa8] sm:$0xff] %vm1056, %v2904
      %2937 = vst.msk [vmem:[%s359 + $0xb0] sm:$0xff] %vm1056, %v2905
      %2938 = vst.msk [vmem:[%s359 + $0xb8] sm:$0xff] %vm1056, %v2906
      %2939 = vst.msk [vmem:[%s359 + $0xc0] sm:$0xff] %vm1056, %v2907
      %2940 = vst.msk [vmem:[%s359 + $0xc8] sm:$0xff] %vm1056, %v2908
      %2941 = vst.msk [vmem:[%s359 + $0xd0] sm:$0xff] %vm1056, %v2909
      %2942 = vst.msk [vmem:[%s359 + $0xd8] sm:$0xff] %vm1056, %v2910
      %2943 = vst.msk [vmem:[%s359 + $0xe0] sm:$0xff] %vm1056, %v2911
      %2944 = vst.msk [vmem:[%s359 + $0xe8] sm:$0xff] %vm1056, %v2912
      %2945 = vst.msk [vmem:[%s359 + $0xf0] sm:$0xff] %vm1056, %v2913
      %2946 = vst.msk [vmem:[%s359 + $0xf8] sm:$0xff] %vm1056, %v2914
      %p2947 = scmp.lt.s32.totalorder %s21, 1
      %s2948 = scalar_select %p2947, %s21, 1
      %s2949 = smul.addr %s2948, 32
      %s2950 = smul.addr %s2949, 8
      %s2951 = scalar_lea.vmem %s10, %s2950
      // Predicated region
      $region61: #{tpu_custom_call.1} parent=59 // pred_check
        %p2952 = pneg %p254
      $region62: #{tpu_custom_call.1} parent=59 // pred_check_branch
        %2954 = sbr.rel (%p2952) target = $region64
      $region63: #{tpu_custom_call.1} parent=59 // pred_region
        _
      $region64: #{tpu_custom_call.1} parent=59 // pred_fallthru
        _
    $region60: #{tpu_custom_call.1} parent=5 // pred_fallthru
      _
    %p2955 = scmp.le.s32.totalorder 2, %s16
    // Predicated region
    $region65: #{tpu_custom_call.1} parent=5 // pred_check
      %p2956 = pneg %p2955
    $region66: #{tpu_custom_call.1} parent=5 // pred_check_branch
      %2958 = sbr.rel (%p2956) target = $region68
    $region67: #{tpu_custom_call.1} parent=5 // pred_region
      %s2959 = ssub.s32 %s16, 2
      // Predicated region
      $region69: #{tpu_custom_call.1} parent=67 // pred_check
        %p2960 = pneg %p260
      $region70: #{tpu_custom_call.1} parent=67 // pred_check_branch
        %2962 = sbr.rel (%p2960) target = $region72
      $region71: #{tpu_custom_call.1} parent=67 // pred_region
        %p2963 = scmp.lt.s32.totalorder %s22, 1
        %s2964 = scalar_select %p2963, %s22, 1
        %s2965 = smul.addr %s2964, 32
        %s2966 = smul.addr %s2965, 8
        %s2967 = scalar_lea.vmem %s10, %s2966
      $region72: #{tpu_custom_call.1} parent=67 // pred_fallthru
        _
    $region68: #{tpu_custom_call.1} parent=5 // pred_fallthru
      _
  $region6: #{tpu_custom_call.1} parent=0 // loop_footer
    %s20 = sadd.s32 1, %s16
  $region7: #{tpu_custom_call.1} parent=0 // loop_footer_branch
    %15 = sbr.rel target = $region3
  $region8: #{tpu_custom_call.1} parent=0 // loop_exit
    _

</llo_original>
